<compile_context>
chip_gen: v7x
topology: tpu7x:2x2x1
jax: 0.10.0
libtpu: 0.0.40
codegen_flags: <defaults>
</compile_context>

<pallas_src>
import functools
import math

import jax
import jax.numpy as jnp
import numpy as np
from jax.experimental import pallas as pl
from jax.experimental.pallas import tpu as pltpu

SELU_ALPHA = 1.6732632423543772
SELU_SCALE = 1.0507009873554805
K2 = 5                      # spatial conv kernel size (fixed by the PyTorch module)
P2 = (K2 - 1) // 2


def cbam_kernel(x_ref, colmask_ref, w1_ref, w2_ref, bn_ref, o_ref, *, W, c_chunk):
    Bt, C, HW = x_ref.shape
    K1 = w1_ref.shape[0]
    P1 = (K1 - 1) // 2
    PAD = P2 * W + P2                                    # lane zero-pad so every (dy,dx) shift is in-bounds

    chunks = [(c0, min(c_chunk, C - c0)) for c0 in range(0, C, c_chunk)]

    # ---------------- Pass 1: ECA channel gate (chunked pooling, no full f32 slab) ----------------
    avg_parts, max_parts = [], []
    for c0, cs in chunks:
        xc = x_ref[:, c0:c0 + cs, :].astype(jnp.float32)         # (Bt, cs, HW) chunk upcast only
        avg_parts.append(jnp.sum(xc, axis=2, keepdims=True) * (1.0 / HW))
        max_parts.append(jnp.max(xc, axis=2, keepdims=True))
    avg = avg_parts[0] if len(avg_parts) == 1 else jnp.concatenate(avg_parts, axis=1)
    mx = max_parts[0] if len(max_parts) == 1 else jnp.concatenate(max_parts, axis=1)
    pooled = jnp.concatenate([avg, mx], axis=2)                   # (Bt, C, 2): avg & max share the conv
    # TODO(synk): for C >= ~512 re-layout pooled lane-major (Bt*2, C) so the K1 taps become lane slices.

    if P1 > 0:
        zc = jnp.zeros((Bt, P1, 2), jnp.float32)
        pooled = jnp.concatenate([zc, pooled, zc], axis=1)        # (Bt, C + 2*P1, 2)
    conv = w1_ref[0] * pooled[:, 0:C, :]
    for j in range(1, K1):                                        # static unroll, sublane-offset slices
        conv = conv + w1_ref[j] * pooled[:, j:j + C, :]
    ch_att = jax.nn.sigmoid(conv[:, :, 0:1] + conv[:, :, 1:2])    # (Bt, C, 1)

    # ---------------- Pass 2: spatial-gate channel pools from x*ch_att (chunked; x1 never materialized) ----
    cmax = None
    csum = jnp.zeros((Bt, 1, HW), jnp.float32)
    for c0, cs in chunks:
        xc = x_ref[:, c0:c0 + cs, :].astype(jnp.float32) * ch_att[:, c0:c0 + cs, :]
        m = jnp.max(xc, axis=1, keepdims=True)                    # (Bt, 1, HW)
        cmax = m if cmax is None else jnp.maximum(cmax, m)
        csum = csum + jnp.sum(xc, axis=1, keepdims=True)
    cmean = csum * (1.0 / C)
    maps = jnp.concatenate([cmax, cmean], axis=1)                 # (Bt, 2, HW): one conv pass for both
    # TODO(synk): if bundle dumps show VALU/XLU binding, pack maps as (2*Bt, HW) to fill sublanes.

    # ---------------- Spatial 5x5 conv on the flattened lane axis ----------------
    zl = jnp.zeros((Bt, 2, PAD), jnp.float32)
    mp = jnp.concatenate([zl, maps, zl], axis=2)                  # (Bt, 2, HW + 2*PAD)
    cmask = colmask_ref[...]                                      # (K2, 1, HW) column-validity masks

    acc = jnp.zeros((Bt, 2, HW), jnp.float32)
    for kx in range(K2):                                          # 5 edge-mask multiplies total
        dx = kx - P2
        acc_dx = jnp.zeros((Bt, 2, HW), jnp.float32)
        for ky in range(K2):                                      # 25 shifted-slice FMAs total
            dy = ky - P2
            start = PAD + dy * W + dx
            acc_dx = acc_dx + w2_ref[ky * K2 + kx] * mp[:, :, start:start + HW]
        acc = acc + acc_dx * cmask[kx:kx + 1]

    v = acc * bn_ref[0] + bn_ref[1]                               # eval-mode BatchNorm2d (folded)
    r = SELU_SCALE * jnp.where(v > 0.0, v,
                               SELU_ALPHA * (jnp.exp(jnp.minimum(v, 0.0)) - 1.0))
    sp = jax.nn.sigmoid(r[:, 0:1, :] + r[:, 1:2, :])              # (Bt, 1, HW)

    # ---------------- Pass 3: fused chunked store x * ch_att * sp (no full x1/out f32 slab) ----------------
    for c0, cs in chunks:
        xc = x_ref[:, c0:c0 + cs, :].astype(jnp.float32)
        o_ref[:, c0:c0 + cs, :] = (xc * ch_att[:, c0:c0 + cs, :] * sp).astype(o_ref.dtype)


def _device_vmem_bytes():
    """Physical VMEM per core; conservative (v7x-sized) fallback if the query fails."""
    try:
        return int(pltpu.get_tpu_info().vmem_capacity_bytes)
    except Exception:
        return 64 << 20


def _choose_block_batch(B, bytes_per_image, target_block_bytes, min_steps, prefer_even_steps):
    """Largest divisor of B that (a) fits the per-generation block-size target and (b) leaves
    enough grid steps for the pipeline (and an even count on 2-TC chips when possible)."""
    cap = max(1, min(B, target_block_bytes // max(1, bytes_per_image)))
    divisors = [d for d in range(1, B + 1) if B % d == 0]

    def score(bt):
        steps = B // bt
        fits = bt <= cap
        enough = steps >= min(min_steps, B)
        even = (steps % 2 == 0) or (not prefer_even_steps)
        return (fits, enough, even, bt)

    return max(divisors, key=score)


def _choose_c_chunk(bt, C, HW):
    """Channel-chunk size: ~1 MiB f32 chunks, multiple of 8 sublanes when possible."""
    target = max(1, (1 << 20) // max(1, bt * HW * 4))
    cs = min(C, max(8, target))
    if cs >= 8:
        cs -= cs % 8
    return max(1, cs)


def _vmem_estimate(bt, C, HW, W, itemsize, c_chunk, buffers):
    """Per-step working set: pipeline I/O buffers + chunk temps + spatial/ECA slabs + headroom."""
    blk = bt * C * HW
    pad = P2 * W + P2
    io = 2 * buffers * blk * itemsize                     # input + output, `buffers`-deep each
    chunk_tmp = 4 * bt * c_chunk * HW * 4                 # live chunk-size f32 temporaries
    spatial = 8 * bt * 2 * (HW + 2 * pad) * 4             # maps / mp / acc / acc_dx / v / r / sp
    eca = 8 * bt * (C + 8) * 4                            # pooled / conv / ch_att
    colmask = buffers * K2 * HW * 4
    internal = 2 << 20                                    # Mosaic internal scratch headroom
    return io + chunk_tmp + spatial + eca + colmask + internal


def cbam_pallas(x, w1, w2, bn_scale, bn_bias, *, block_batch=None):
    """CBAM forward.  x: (B,C,H,W).  w1: (K1,) ECA Conv1d weight.  w2: (5,5) spatial
    Conv2d weight.  bn_scale/bn_bias: folded eval-mode BatchNorm2d(1) affine."""
    B, C, H, W = x.shape
    HW = H * W
    itemsize = x.dtype.itemsize

    # ---- generation-aware tiling parameters ----
    vmem_phys = _device_vmem_bytes()
    small_vmem = vmem_phys <= (64 << 20)                  # v7x-class: 64 MiB VMEM, 2 TCs
    if small_vmem:
        target_block = 4 << 20
        min_steps = 4                                     # >=2 pipelined steps per TensorCore
        prefer_even = True
        vmem_clamp = min(44 << 20, (vmem_phys * 3) // 4)
    else:                                                 # v5e / v6e: 128 MiB VMEM, 1 TC
        target_block = 12 << 20
        min_steps = 2
        prefer_even = False
        vmem_clamp = min(96 << 20, (vmem_phys * 3) // 4)

    if block_batch is not None:
        bt = block_batch
        assert B % bt == 0
    else:
        bt = _choose_block_batch(B, C * HW * itemsize, target_block, min_steps, prefer_even)

    c_chunk = _choose_c_chunk(bt, C, HW)
    buffers = 2
    # Shrink bt while the double-buffered working set exceeds the per-generation budget.
    while bt > 1 and _vmem_estimate(bt, C, HW, W, itemsize, c_chunk, buffers) > vmem_clamp:
        nbt = bt - 1
        while nbt > 1 and B % nbt != 0:
            nbt -= 1
        bt = nbt
        c_chunk = _choose_c_chunk(bt, C, HW)
    if bt == 1 and _vmem_estimate(bt, C, HW, W, itemsize, c_chunk, buffers) > vmem_clamp:
        buffers = 1                                       # single-buffer the big I/O blocks
        # TODO(synk): for even larger C*H*W, tile H with a P2-row halo and split the
        # channel-gate pooling into a two-pass accumulator grid axis.

    vmem_need = _vmem_estimate(bt, C, HW, W, itemsize, c_chunk, buffers)
    hard_cap = (vmem_phys * 7) // 8
    vmem_limit = int(min(max(vmem_need, 16 << 20), hard_cap))

    grid = (B // bt,)

    # Lane-dense view (free reshape; contiguous).
    x_flat = x.reshape(B, C, HW)

    w1 = jnp.asarray(w1, jnp.float32).reshape(-1)
    w2_flat = jnp.asarray(w2, jnp.float32).reshape(-1)
    bn = jnp.asarray([bn_scale, bn_bias], jnp.float32)

    # Column-validity masks for the 5 horizontal offsets of the 5x5 conv: the flattened-lane
    # conv must zero contributions that would wrap across image rows (matches zero padding).
    col = np.arange(HW) % W
    colmask = np.stack(
        [((col + dx >= 0) & (col + dx < W)).astype(np.float32) for dx in range(-P2, P2 + 1)],
        axis=0).reshape(K2, 1, HW)
    colmask = jnp.asarray(colmask)

    def act_spec():
        if buffers == 2:
            return pl.BlockSpec((bt, C, HW), lambda b: (b, 0, 0))
        return pl.BlockSpec((bt, C, HW), lambda b: (b, 0, 0), pipeline_mode=pl.Buffered(1))

    out_flat = pl.pallas_call(
        functools.partial(cbam_kernel, W=W, c_chunk=c_chunk),
        out_shape=jax.ShapeDtypeStruct((B, C, HW), x.dtype),
        grid=grid,
        in_specs=[
            act_spec(),                                            # activations (lane-dense)
            pl.BlockSpec((K2, 1, HW), lambda b: (0, 0, 0)),        # column masks (resident)
            pl.BlockSpec(memory_space=pltpu.MemorySpace.SMEM),     # ECA conv1d weights
            pl.BlockSpec(memory_space=pltpu.MemorySpace.SMEM),     # 5x5 spatial conv weights
            pl.BlockSpec(memory_space=pltpu.MemorySpace.SMEM),     # folded BN (scale, bias)
        ],
        out_specs=act_spec(),
        compiler_params=pltpu.CompilerParams(
            dimension_semantics=("parallel",),
            vmem_limit_bytes=vmem_limit),
    )(x_flat, colmask, w1, w2_flat, bn)
    return out_flat.reshape(B, C, H, W)


def cbam_ref(x, w1, w2, bn_scale, bn_bias):
    """Pure-JAX reference matching the PyTorch forward (eval-mode BN)."""
    B, C, H, W = x.shape
    K1 = w1.shape[0]
    P1 = (K1 - 1) // 2
    avg = jnp.mean(x, axis=(2, 3))
    mx = jnp.max(x, axis=(2, 3))

    def conv1d(y):
        yp = jnp.pad(y, ((0, 0), (P1, P1)))
        return sum(w1[j] * yp[:, j:j + C] for j in range(K1))

    att = jax.nn.sigmoid(conv1d(avg) + conv1d(mx))[:, :, None, None]
    x1 = x * att
    cmax = jnp.max(x1, axis=1)
    cmean = jnp.mean(x1, axis=1)

    def branch(m):
        mp = jnp.pad(m, ((0, 0), (P2, P2), (P2, P2)))
        acc = sum(w2[ky, kx] * mp[:, ky:ky + H, kx:kx + W]
                  for ky in range(K2) for kx in range(K2))
        v = acc * bn_scale + bn_bias
        return SELU_SCALE * jnp.where(v > 0, v, SELU_ALPHA * (jnp.exp(v) - 1.0))

    sc = jax.nn.sigmoid(branch(cmax) + branch(cmean))[:, None, :, :]
    return x1 * sc


if __name__ == "__main__":
    B, C, H, W = 2, 16, 16, 16
    key = jax.random.PRNGKey(0)
    kx_, k1, k2 = jax.random.split(key, 3)
    x = jax.random.normal(kx_, (B, C, H, W), jnp.float32)

    # ECA adaptive kernel size (gamma=2, b=1): for C=16 -> k_size=3
    t = int(abs((math.log2(C) + 1) / 2.0))
    K1 = t if t % 2 else t + 1
    w1 = jax.random.normal(k1, (K1,), jnp.float32) * 0.5       # Conv1d(1,1,K1,bias=False) weight
    w2 = jax.random.normal(k2, (K2, K2), jnp.float32) * 0.1    # Conv2d(1,1,5,5,bias=False) weight

    # BatchNorm2d(1), eval-mode running stats, folded into scale/bias.
    gamma, beta, rmean, rvar, eps = 1.2, 0.1, 0.05, 0.9, 1e-5
    bn_scale = gamma / math.sqrt(rvar + eps)
    bn_bias = beta - rmean * bn_scale

    out = jax.block_until_ready(cbam_pallas(x, w1, w2, bn_scale, bn_bias))

    ref = cbam_ref(x, w1, w2, bn_scale, bn_bias)
    assert out.shape == x.shape and out.dtype == x.dtype
    err = float(jnp.max(jnp.abs(out - ref)))
    assert jnp.allclose(out, ref, rtol=1e-5, atol=1e-5), err
    print("KERNEL_OK")
</pallas_src>

<mosaic_0001>
module attributes {stable_mosaic.version = 11 : i64} {
  func.func @cbam_kernel(%arg0: i32, %arg1: memref<1x16x256xf32, #tpu.memory_space<vmem>>, %arg2: memref<5x1x256xf32, #tpu.memory_space<vmem>>, %arg3: memref<3xf32, #tpu.memory_space<smem>>, %arg4: memref<25xf32, #tpu.memory_space<smem>>, %arg5: memref<2xf32, #tpu.memory_space<smem>>, %arg6: memref<1x16x256xf32, #tpu.memory_space<vmem>>) attributes {dimension_semantics = [#tpu.dimension_semantics<parallel>], iteration_bounds = array<i64: 2>, scalar_prefetch = 0 : i64, scratch_operands = 0 : i64, tpu.core_type = #tpu.core_type<tc>, window_params = [{transform_indices = @transform_0, window_bounds = array<i64: 1, 16, 256>}, {pipeline_mode = #tpu.pipeline_mode<synchronous>, transform_indices = @transform_1, window_bounds = array<i64: 5, 1, 256>}, {transform_indices = @transform_2, window_bounds = array<i64: 3>}, {transform_indices = @transform_3, window_bounds = array<i64: 25>}, {transform_indices = @transform_4, window_bounds = array<i64: 2>}, {transform_indices = @transform_5, window_bounds = array<i64: 1, 16, 256>}]} {
    %c0 = arith.constant 0 : index
    %c0_0 = arith.constant 0 : index
    %c0_1 = arith.constant 0 : index
    %0 = vector.load %arg1[%c0, %c0_0, %c0_1] : memref<1x16x256xf32, #tpu.memory_space<vmem>>, vector<1x16x256xf32>
    %cst = arith.constant dense<0.000000e+00> : vector<1x16xf32>
    %1 = vector.multi_reduction <add>, %0, %cst [2] : vector<1x16x256xf32> to vector<1x16xf32>
    %2 = vector.shape_cast %1 : vector<1x16xf32> to vector<1x16x1xf32>
    %cst_2 = arith.constant 3.906250e-03 : f32
    %3 = vector.broadcast %cst_2 : f32 to vector<1x16x1xf32>
    %4 = arith.mulf %2, %3 : vector<1x16x1xf32>
    %cst_3 = arith.constant dense<0xFF800000> : vector<1x16xf32>
    %5 = vector.multi_reduction <maximumf>, %0, %cst_3 [2] : vector<1x16x256xf32> to vector<1x16xf32>
    %6 = vector.shape_cast %5 : vector<1x16xf32> to vector<1x16x1xf32>
    %7 = tpu.concatenate %4, %6 in 2 : vector<1x16x1xf32>, vector<1x16x1xf32> -> vector<1x16x2xf32>
    %cst_4 = arith.constant 0.000000e+00 : f32
    %8 = vector.broadcast %cst_4 : f32 to vector<1x1x2xf32>
    %9 = tpu.concatenate %8, %7, %8 in 1 : vector<1x1x2xf32>, vector<1x16x2xf32>, vector<1x1x2xf32> -> vector<1x18x2xf32>
    %c0_5 = arith.constant 0 : index
    %10 = memref.load %arg3[%c0_5] : memref<3xf32, #tpu.memory_space<smem>>
    %11 = vector.extract_strided_slice %9 {offsets = [0, 0, 0], sizes = [1, 16, 2], strides = [1, 1, 1]} : vector<1x18x2xf32> to vector<1x16x2xf32>
    %12 = vector.broadcast %10 : f32 to vector<1x16x2xf32>
    %13 = arith.mulf %12, %11 : vector<1x16x2xf32>
    %c1 = arith.constant 1 : index
    %14 = memref.load %arg3[%c1] : memref<3xf32, #tpu.memory_space<smem>>
    %15 = vector.extract_strided_slice %9 {offsets = [0, 1, 0], sizes = [1, 16, 2], strides = [1, 1, 1]} : vector<1x18x2xf32> to vector<1x16x2xf32>
    %16 = vector.broadcast %14 : f32 to vector<1x16x2xf32>
    %17 = arith.mulf %16, %15 : vector<1x16x2xf32>
    %18 = arith.addf %13, %17 : vector<1x16x2xf32>
    %c2 = arith.constant 2 : index
    %19 = memref.load %arg3[%c2] : memref<3xf32, #tpu.memory_space<smem>>
    %20 = vector.extract_strided_slice %9 {offsets = [0, 2, 0], sizes = [1, 16, 2], strides = [1, 1, 1]} : vector<1x18x2xf32> to vector<1x16x2xf32>
    %21 = vector.broadcast %19 : f32 to vector<1x16x2xf32>
    %22 = arith.mulf %21, %20 : vector<1x16x2xf32>
    %23 = arith.addf %18, %22 : vector<1x16x2xf32>
    %24 = vector.extract_strided_slice %23 {offsets = [0, 0, 0], sizes = [1, 16, 1], strides = [1, 1, 1]} : vector<1x16x2xf32> to vector<1x16x1xf32>
    %25 = vector.extract_strided_slice %23 {offsets = [0, 0, 1], sizes = [1, 16, 1], strides = [1, 1, 1]} : vector<1x16x2xf32> to vector<1x16x1xf32>
    %26 = arith.addf %24, %25 : vector<1x16x1xf32>
    %27 = arith.negf %26 : vector<1x16x1xf32>
    %28 = math.exp %27 : vector<1x16x1xf32>
    %cst_6 = arith.constant 1.000000e+00 : f32
    %29 = vector.broadcast %cst_6 : f32 to vector<1x16x1xf32>
    %30 = arith.addf %29, %28 : vector<1x16x1xf32>
    %31 = arith.divf %29, %30 : vector<1x16x1xf32>
    %cst_7 = arith.constant 0.000000e+00 : f32
    %32 = vector.broadcast %cst_7 : f32 to vector<1x1x256xf32>
    %c0_8 = arith.constant 0 : index
    %c0_9 = arith.constant 0 : index
    %c0_10 = arith.constant 0 : index
    %33 = vector.load %arg1[%c0_8, %c0_9, %c0_10] : memref<1x16x256xf32, #tpu.memory_space<vmem>>, vector<1x16x256xf32>
    %34 = vector.broadcast %31 : vector<1x16x1xf32> to vector<1x16x256xf32>
    %35 = arith.mulf %33, %34 : vector<1x16x256xf32>
    %cst_11 = arith.constant dense<0xFF800000> : vector<1x256xf32>
    %36 = vector.multi_reduction <maximumf>, %35, %cst_11 [1] : vector<1x16x256xf32> to vector<1x256xf32>
    %37 = vector.shape_cast %36 : vector<1x256xf32> to vector<1x1x256xf32>
    %cst_12 = arith.constant dense<0.000000e+00> : vector<1x256xf32>
    %38 = vector.multi_reduction <add>, %35, %cst_12 [1] : vector<1x16x256xf32> to vector<1x256xf32>
    %39 = vector.shape_cast %38 : vector<1x256xf32> to vector<1x1x256xf32>
    %40 = arith.addf %32, %39 : vector<1x1x256xf32>
    %cst_13 = arith.constant 6.250000e-02 : f32
    %41 = vector.broadcast %cst_13 : f32 to vector<1x1x256xf32>
    %42 = arith.mulf %40, %41 : vector<1x1x256xf32>
    %43 = tpu.concatenate %37, %42 in 1 : vector<1x1x256xf32>, vector<1x1x256xf32> -> vector<1x2x256xf32>
    %cst_14 = arith.constant 0.000000e+00 : f32
    %44 = vector.broadcast %cst_14 : f32 to vector<1x2x34xf32>
    %45 = tpu.concatenate %44, %43, %44 in 2 : vector<1x2x34xf32>, vector<1x2x256xf32>, vector<1x2x34xf32> -> vector<1x2x324xf32>
    %c0_15 = arith.constant 0 : index
    %c0_16 = arith.constant 0 : index
    %c0_17 = arith.constant 0 : index
    %46 = vector.load %arg2[%c0_15, %c0_16, %c0_17] : memref<5x1x256xf32, #tpu.memory_space<vmem>>, vector<5x1x256xf32>
    %cst_18 = arith.constant 0.000000e+00 : f32
    %47 = vector.broadcast %cst_18 : f32 to vector<1x2x256xf32>
    %cst_19 = arith.constant 0.000000e+00 : f32
    %48 = vector.broadcast %cst_19 : f32 to vector<1x2x256xf32>
    %c0_20 = arith.constant 0 : index
    %49 = memref.load %arg4[%c0_20] : memref<25xf32, #tpu.memory_space<smem>>
    %50 = vector.extract_strided_slice %45 {offsets = [0, 0, 0], sizes = [1, 2, 256], strides = [1, 1, 1]} : vector<1x2x324xf32> to vector<1x2x256xf32>
    %51 = vector.broadcast %49 : f32 to vector<1x2x256xf32>
    %52 = arith.mulf %51, %50 : vector<1x2x256xf32>
    %53 = arith.addf %48, %52 : vector<1x2x256xf32>
    %c5 = arith.constant 5 : index
    %54 = memref.load %arg4[%c5] : memref<25xf32, #tpu.memory_space<smem>>
    %55 = vector.extract_strided_slice %45 {offsets = [0, 0, 16], sizes = [1, 2, 256], strides = [1, 1, 1]} : vector<1x2x324xf32> to vector<1x2x256xf32>
    %56 = vector.broadcast %54 : f32 to vector<1x2x256xf32>
    %57 = arith.mulf %56, %55 : vector<1x2x256xf32>
    %58 = arith.addf %53, %57 : vector<1x2x256xf32>
    %c10 = arith.constant 10 : index
    %59 = memref.load %arg4[%c10] : memref<25xf32, #tpu.memory_space<smem>>
    %60 = vector.extract_strided_slice %45 {offsets = [0, 0, 32], sizes = [1, 2, 256], strides = [1, 1, 1]} : vector<1x2x324xf32> to vector<1x2x256xf32>
    %61 = vector.broadcast %59 : f32 to vector<1x2x256xf32>
    %62 = arith.mulf %61, %60 : vector<1x2x256xf32>
    %63 = arith.addf %58, %62 : vector<1x2x256xf32>
    %c15 = arith.constant 15 : index
    %64 = memref.load %arg4[%c15] : memref<25xf32, #tpu.memory_space<smem>>
    %65 = vector.extract_strided_slice %45 {offsets = [0, 0, 48], sizes = [1, 2, 256], strides = [1, 1, 1]} : vector<1x2x324xf32> to vector<1x2x256xf32>
    %66 = vector.broadcast %64 : f32 to vector<1x2x256xf32>
    %67 = arith.mulf %66, %65 : vector<1x2x256xf32>
    %68 = arith.addf %63, %67 : vector<1x2x256xf32>
    %c20 = arith.constant 20 : index
    %69 = memref.load %arg4[%c20] : memref<25xf32, #tpu.memory_space<smem>>
    %70 = vector.extract_strided_slice %45 {offsets = [0, 0, 64], sizes = [1, 2, 256], strides = [1, 1, 1]} : vector<1x2x324xf32> to vector<1x2x256xf32>
    %71 = vector.broadcast %69 : f32 to vector<1x2x256xf32>
    %72 = arith.mulf %71, %70 : vector<1x2x256xf32>
    %73 = arith.addf %68, %72 : vector<1x2x256xf32>
    %74 = vector.extract_strided_slice %46 {offsets = [0, 0, 0], sizes = [1, 1, 256], strides = [1, 1, 1]} : vector<5x1x256xf32> to vector<1x1x256xf32>
    %75 = vector.broadcast %74 : vector<1x1x256xf32> to vector<1x2x256xf32>
    %76 = arith.mulf %73, %75 : vector<1x2x256xf32>
    %77 = arith.addf %47, %76 : vector<1x2x256xf32>
    %cst_21 = arith.constant 0.000000e+00 : f32
    %78 = vector.broadcast %cst_21 : f32 to vector<1x2x256xf32>
    %c1_22 = arith.constant 1 : index
    %79 = memref.load %arg4[%c1_22] : memref<25xf32, #tpu.memory_space<smem>>
    %80 = vector.extract_strided_slice %45 {offsets = [0, 0, 1], sizes = [1, 2, 256], strides = [1, 1, 1]} : vector<1x2x324xf32> to vector<1x2x256xf32>
    %81 = vector.broadcast %79 : f32 to vector<1x2x256xf32>
    %82 = arith.mulf %81, %80 : vector<1x2x256xf32>
    %83 = arith.addf %78, %82 : vector<1x2x256xf32>
    %c6 = arith.constant 6 : index
    %84 = memref.load %arg4[%c6] : memref<25xf32, #tpu.memory_space<smem>>
    %85 = vector.extract_strided_slice %45 {offsets = [0, 0, 17], sizes = [1, 2, 256], strides = [1, 1, 1]} : vector<1x2x324xf32> to vector<1x2x256xf32>
    %86 = vector.broadcast %84 : f32 to vector<1x2x256xf32>
    %87 = arith.mulf %86, %85 : vector<1x2x256xf32>
    %88 = arith.addf %83, %87 : vector<1x2x256xf32>
    %c11 = arith.constant 11 : index
    %89 = memref.load %arg4[%c11] : memref<25xf32, #tpu.memory_space<smem>>
    %90 = vector.extract_strided_slice %45 {offsets = [0, 0, 33], sizes = [1, 2, 256], strides = [1, 1, 1]} : vector<1x2x324xf32> to vector<1x2x256xf32>
    %91 = vector.broadcast %89 : f32 to vector<1x2x256xf32>
    %92 = arith.mulf %91, %90 : vector<1x2x256xf32>
    %93 = arith.addf %88, %92 : vector<1x2x256xf32>
    %c16 = arith.constant 16 : index
    %94 = memref.load %arg4[%c16] : memref<25xf32, #tpu.memory_space<smem>>
    %95 = vector.extract_strided_slice %45 {offsets = [0, 0, 49], sizes = [1, 2, 256], strides = [1, 1, 1]} : vector<1x2x324xf32> to vector<1x2x256xf32>
    %96 = vector.broadcast %94 : f32 to vector<1x2x256xf32>
    %97 = arith.mulf %96, %95 : vector<1x2x256xf32>
    %98 = arith.addf %93, %97 : vector<1x2x256xf32>
    %c21 = arith.constant 21 : index
    %99 = memref.load %arg4[%c21] : memref<25xf32, #tpu.memory_space<smem>>
    %100 = vector.extract_strided_slice %45 {offsets = [0, 0, 65], sizes = [1, 2, 256], strides = [1, 1, 1]} : vector<1x2x324xf32> to vector<1x2x256xf32>
    %101 = vector.broadcast %99 : f32 to vector<1x2x256xf32>
    %102 = arith.mulf %101, %100 : vector<1x2x256xf32>
    %103 = arith.addf %98, %102 : vector<1x2x256xf32>
    %104 = vector.extract_strided_slice %46 {offsets = [1, 0, 0], sizes = [1, 1, 256], strides = [1, 1, 1]} : vector<5x1x256xf32> to vector<1x1x256xf32>
    %105 = vector.broadcast %104 : vector<1x1x256xf32> to vector<1x2x256xf32>
    %106 = arith.mulf %103, %105 : vector<1x2x256xf32>
    %107 = arith.addf %77, %106 : vector<1x2x256xf32>
    %cst_23 = arith.constant 0.000000e+00 : f32
    %108 = vector.broadcast %cst_23 : f32 to vector<1x2x256xf32>
    %c2_24 = arith.constant 2 : index
    %109 = memref.load %arg4[%c2_24] : memref<25xf32, #tpu.memory_space<smem>>
    %110 = vector.extract_strided_slice %45 {offsets = [0, 0, 2], sizes = [1, 2, 256], strides = [1, 1, 1]} : vector<1x2x324xf32> to vector<1x2x256xf32>
    %111 = vector.broadcast %109 : f32 to vector<1x2x256xf32>
    %112 = arith.mulf %111, %110 : vector<1x2x256xf32>
    %113 = arith.addf %108, %112 : vector<1x2x256xf32>
    %c7 = arith.constant 7 : index
    %114 = memref.load %arg4[%c7] : memref<25xf32, #tpu.memory_space<smem>>
    %115 = vector.extract_strided_slice %45 {offsets = [0, 0, 18], sizes = [1, 2, 256], strides = [1, 1, 1]} : vector<1x2x324xf32> to vector<1x2x256xf32>
    %116 = vector.broadcast %114 : f32 to vector<1x2x256xf32>
    %117 = arith.mulf %116, %115 : vector<1x2x256xf32>
    %118 = arith.addf %113, %117 : vector<1x2x256xf32>
    %c12 = arith.constant 12 : index
    %119 = memref.load %arg4[%c12] : memref<25xf32, #tpu.memory_space<smem>>
    %120 = vector.extract_strided_slice %45 {offsets = [0, 0, 34], sizes = [1, 2, 256], strides = [1, 1, 1]} : vector<1x2x324xf32> to vector<1x2x256xf32>
    %121 = vector.broadcast %119 : f32 to vector<1x2x256xf32>
    %122 = arith.mulf %121, %120 : vector<1x2x256xf32>
    %123 = arith.addf %118, %122 : vector<1x2x256xf32>
    %c17 = arith.constant 17 : index
    %124 = memref.load %arg4[%c17] : memref<25xf32, #tpu.memory_space<smem>>
    %125 = vector.extract_strided_slice %45 {offsets = [0, 0, 50], sizes = [1, 2, 256], strides = [1, 1, 1]} : vector<1x2x324xf32> to vector<1x2x256xf32>
    %126 = vector.broadcast %124 : f32 to vector<1x2x256xf32>
    %127 = arith.mulf %126, %125 : vector<1x2x256xf32>
    %128 = arith.addf %123, %127 : vector<1x2x256xf32>
    %c22 = arith.constant 22 : index
    %129 = memref.load %arg4[%c22] : memref<25xf32, #tpu.memory_space<smem>>
    %130 = vector.extract_strided_slice %45 {offsets = [0, 0, 66], sizes = [1, 2, 256], strides = [1, 1, 1]} : vector<1x2x324xf32> to vector<1x2x256xf32>
    %131 = vector.broadcast %129 : f32 to vector<1x2x256xf32>
    %132 = arith.mulf %131, %130 : vector<1x2x256xf32>
    %133 = arith.addf %128, %132 : vector<1x2x256xf32>
    %134 = vector.extract_strided_slice %46 {offsets = [2, 0, 0], sizes = [1, 1, 256], strides = [1, 1, 1]} : vector<5x1x256xf32> to vector<1x1x256xf32>
    %135 = vector.broadcast %134 : vector<1x1x256xf32> to vector<1x2x256xf32>
    %136 = arith.mulf %133, %135 : vector<1x2x256xf32>
    %137 = arith.addf %107, %136 : vector<1x2x256xf32>
    %cst_25 = arith.constant 0.000000e+00 : f32
    %138 = vector.broadcast %cst_25 : f32 to vector<1x2x256xf32>
    %c3 = arith.constant 3 : index
    %139 = memref.load %arg4[%c3] : memref<25xf32, #tpu.memory_space<smem>>
    %140 = vector.extract_strided_slice %45 {offsets = [0, 0, 3], sizes = [1, 2, 256], strides = [1, 1, 1]} : vector<1x2x324xf32> to vector<1x2x256xf32>
    %141 = vector.broadcast %139 : f32 to vector<1x2x256xf32>
    %142 = arith.mulf %141, %140 : vector<1x2x256xf32>
    %143 = arith.addf %138, %142 : vector<1x2x256xf32>
    %c8 = arith.constant 8 : index
    %144 = memref.load %arg4[%c8] : memref<25xf32, #tpu.memory_space<smem>>
    %145 = vector.extract_strided_slice %45 {offsets = [0, 0, 19], sizes = [1, 2, 256], strides = [1, 1, 1]} : vector<1x2x324xf32> to vector<1x2x256xf32>
    %146 = vector.broadcast %144 : f32 to vector<1x2x256xf32>
    %147 = arith.mulf %146, %145 : vector<1x2x256xf32>
    %148 = arith.addf %143, %147 : vector<1x2x256xf32>
    %c13 = arith.constant 13 : index
    %149 = memref.load %arg4[%c13] : memref<25xf32, #tpu.memory_space<smem>>
    %150 = vector.extract_strided_slice %45 {offsets = [0, 0, 35], sizes = [1, 2, 256], strides = [1, 1, 1]} : vector<1x2x324xf32> to vector<1x2x256xf32>
    %151 = vector.broadcast %149 : f32 to vector<1x2x256xf32>
    %152 = arith.mulf %151, %150 : vector<1x2x256xf32>
    %153 = arith.addf %148, %152 : vector<1x2x256xf32>
    %c18 = arith.constant 18 : index
    %154 = memref.load %arg4[%c18] : memref<25xf32, #tpu.memory_space<smem>>
    %155 = vector.extract_strided_slice %45 {offsets = [0, 0, 51], sizes = [1, 2, 256], strides = [1, 1, 1]} : vector<1x2x324xf32> to vector<1x2x256xf32>
    %156 = vector.broadcast %154 : f32 to vector<1x2x256xf32>
    %157 = arith.mulf %156, %155 : vector<1x2x256xf32>
    %158 = arith.addf %153, %157 : vector<1x2x256xf32>
    %c23 = arith.constant 23 : index
    %159 = memref.load %arg4[%c23] : memref<25xf32, #tpu.memory_space<smem>>
    %160 = vector.extract_strided_slice %45 {offsets = [0, 0, 67], sizes = [1, 2, 256], strides = [1, 1, 1]} : vector<1x2x324xf32> to vector<1x2x256xf32>
    %161 = vector.broadcast %159 : f32 to vector<1x2x256xf32>
    %162 = arith.mulf %161, %160 : vector<1x2x256xf32>
    %163 = arith.addf %158, %162 : vector<1x2x256xf32>
    %164 = vector.extract_strided_slice %46 {offsets = [3, 0, 0], sizes = [1, 1, 256], strides = [1, 1, 1]} : vector<5x1x256xf32> to vector<1x1x256xf32>
    %165 = vector.broadcast %164 : vector<1x1x256xf32> to vector<1x2x256xf32>
    %166 = arith.mulf %163, %165 : vector<1x2x256xf32>
    %167 = arith.addf %137, %166 : vector<1x2x256xf32>
    %cst_26 = arith.constant 0.000000e+00 : f32
    %168 = vector.broadcast %cst_26 : f32 to vector<1x2x256xf32>
    %c4 = arith.constant 4 : index
    %169 = memref.load %arg4[%c4] : memref<25xf32, #tpu.memory_space<smem>>
    %170 = vector.extract_strided_slice %45 {offsets = [0, 0, 4], sizes = [1, 2, 256], strides = [1, 1, 1]} : vector<1x2x324xf32> to vector<1x2x256xf32>
    %171 = vector.broadcast %169 : f32 to vector<1x2x256xf32>
    %172 = arith.mulf %171, %170 : vector<1x2x256xf32>
    %173 = arith.addf %168, %172 : vector<1x2x256xf32>
    %c9 = arith.constant 9 : index
    %174 = memref.load %arg4[%c9] : memref<25xf32, #tpu.memory_space<smem>>
    %175 = vector.extract_strided_slice %45 {offsets = [0, 0, 20], sizes = [1, 2, 256], strides = [1, 1, 1]} : vector<1x2x324xf32> to vector<1x2x256xf32>
    %176 = vector.broadcast %174 : f32 to vector<1x2x256xf32>
    %177 = arith.mulf %176, %175 : vector<1x2x256xf32>
    %178 = arith.addf %173, %177 : vector<1x2x256xf32>
    %c14 = arith.constant 14 : index
    %179 = memref.load %arg4[%c14] : memref<25xf32, #tpu.memory_space<smem>>
    %180 = vector.extract_strided_slice %45 {offsets = [0, 0, 36], sizes = [1, 2, 256], strides = [1, 1, 1]} : vector<1x2x324xf32> to vector<1x2x256xf32>
    %181 = vector.broadcast %179 : f32 to vector<1x2x256xf32>
    %182 = arith.mulf %181, %180 : vector<1x2x256xf32>
    %183 = arith.addf %178, %182 : vector<1x2x256xf32>
    %c19 = arith.constant 19 : index
    %184 = memref.load %arg4[%c19] : memref<25xf32, #tpu.memory_space<smem>>
    %185 = vector.extract_strided_slice %45 {offsets = [0, 0, 52], sizes = [1, 2, 256], strides = [1, 1, 1]} : vector<1x2x324xf32> to vector<1x2x256xf32>
    %186 = vector.broadcast %184 : f32 to vector<1x2x256xf32>
    %187 = arith.mulf %186, %185 : vector<1x2x256xf32>
    %188 = arith.addf %183, %187 : vector<1x2x256xf32>
    %c24 = arith.constant 24 : index
    %189 = memref.load %arg4[%c24] : memref<25xf32, #tpu.memory_space<smem>>
    %190 = vector.extract_strided_slice %45 {offsets = [0, 0, 68], sizes = [1, 2, 256], strides = [1, 1, 1]} : vector<1x2x324xf32> to vector<1x2x256xf32>
    %191 = vector.broadcast %189 : f32 to vector<1x2x256xf32>
    %192 = arith.mulf %191, %190 : vector<1x2x256xf32>
    %193 = arith.addf %188, %192 : vector<1x2x256xf32>
    %194 = vector.extract_strided_slice %46 {offsets = [4, 0, 0], sizes = [1, 1, 256], strides = [1, 1, 1]} : vector<5x1x256xf32> to vector<1x1x256xf32>
    %195 = vector.broadcast %194 : vector<1x1x256xf32> to vector<1x2x256xf32>
    %196 = arith.mulf %193, %195 : vector<1x2x256xf32>
    %197 = arith.addf %167, %196 : vector<1x2x256xf32>
    %c0_27 = arith.constant 0 : index
    %198 = memref.load %arg5[%c0_27] : memref<2xf32, #tpu.memory_space<smem>>
    %199 = vector.broadcast %198 : f32 to vector<1x2x256xf32>
    %200 = arith.mulf %197, %199 : vector<1x2x256xf32>
    %c1_28 = arith.constant 1 : index
    %201 = memref.load %arg5[%c1_28] : memref<2xf32, #tpu.memory_space<smem>>
    %202 = vector.broadcast %201 : f32 to vector<1x2x256xf32>
    %203 = arith.addf %200, %202 : vector<1x2x256xf32>
    %cst_29 = arith.constant 0.000000e+00 : f32
    %204 = vector.broadcast %cst_29 : f32 to vector<1x2x256xf32>
    %205 = arith.cmpf ogt, %203, %204 : vector<1x2x256xf32>
    %cst_30 = arith.constant 0.000000e+00 : f32
    %206 = vector.broadcast %cst_30 : f32 to vector<1x2x256xf32>
    %207 = arith.minimumf %203, %206 : vector<1x2x256xf32>
    %208 = math.exp %207 : vector<1x2x256xf32>
    %cst_31 = arith.constant 1.000000e+00 : f32
    %209 = vector.broadcast %cst_31 : f32 to vector<1x2x256xf32>
    %210 = arith.subf %208, %209 : vector<1x2x256xf32>
    %cst_32 = arith.constant 1.67326319 : f32
    %211 = vector.broadcast %cst_32 : f32 to vector<1x2x256xf32>
    %212 = arith.mulf %211, %210 : vector<1x2x256xf32>
    %213 = arith.select %205, %203, %212 : vector<1x2x256xi1>, vector<1x2x256xf32>
    %cst_33 = arith.constant 1.05070102 : f32
    %214 = vector.broadcast %cst_33 : f32 to vector<1x2x256xf32>
    %215 = arith.mulf %214, %213 : vector<1x2x256xf32>
    %216 = vector.extract_strided_slice %215 {offsets = [0, 0, 0], sizes = [1, 1, 256], strides = [1, 1, 1]} : vector<1x2x256xf32> to vector<1x1x256xf32>
    %217 = vector.extract_strided_slice %215 {offsets = [0, 1, 0], sizes = [1, 1, 256], strides = [1, 1, 1]} : vector<1x2x256xf32> to vector<1x1x256xf32>
    %218 = arith.addf %216, %217 : vector<1x1x256xf32>
    %219 = arith.negf %218 : vector<1x1x256xf32>
    %220 = math.exp %219 : vector<1x1x256xf32>
    %cst_34 = arith.constant 1.000000e+00 : f32
    %221 = vector.broadcast %cst_34 : f32 to vector<1x1x256xf32>
    %222 = arith.addf %221, %220 : vector<1x1x256xf32>
    %223 = arith.divf %221, %222 : vector<1x1x256xf32>
    %c0_35 = arith.constant 0 : index
    %c0_36 = arith.constant 0 : index
    %c0_37 = arith.constant 0 : index
    %224 = vector.load %arg1[%c0_35, %c0_36, %c0_37] : memref<1x16x256xf32, #tpu.memory_space<vmem>>, vector<1x16x256xf32>
    %225 = vector.broadcast %31 : vector<1x16x1xf32> to vector<1x16x256xf32>
    %226 = arith.mulf %224, %225 : vector<1x16x256xf32>
    %227 = vector.broadcast %223 : vector<1x1x256xf32> to vector<1x16x256xf32>
    %228 = arith.mulf %226, %227 : vector<1x16x256xf32>
    %c0_38 = arith.constant 0 : index
    %c0_39 = arith.constant 0 : index
    %c0_40 = arith.constant 0 : index
    %229 = vector.load %arg6[%c0_38, %c0_39, %c0_40] : memref<1x16x256xf32, #tpu.memory_space<vmem>>, vector<1x16x256xf32>
    tpu.vector_store %arg6[%c0_38, %c0_39, %c0_40], %228 {strides = array<i32>} : memref<1x16x256xf32, #tpu.memory_space<vmem>>, vector<1x16x256xf32>,
    return
  }
  func.func @transform_0(%arg0: i32) -> (i32, i32, i32) {
    %c0_i32 = arith.constant 0 : i32
    %c0_i32_0 = arith.constant 0 : i32
    %c0_i32_1 = arith.constant 0 : i32
    return %arg0, %c0_i32, %c0_i32_0 : i32, i32, i32
  }
  func.func @transform_1(%arg0: i32) -> (i32, i32, i32) {
    %c0_i32 = arith.constant 0 : i32
    %c0_i32_0 = arith.constant 0 : i32
    %c0_i32_1 = arith.constant 0 : i32
    %c0_i32_2 = arith.constant 0 : i32
    return %c0_i32, %c0_i32_0, %c0_i32_1 : i32, i32, i32
  }
  func.func @transform_2(%arg0: i32) -> i32 {
    %c0_i32 = arith.constant 0 : i32
    %c0_i32_0 = arith.constant 0 : i32
    return %c0_i32 : i32
  }
  func.func @transform_3(%arg0: i32) -> i32 {
    %c0_i32 = arith.constant 0 : i32
    %c0_i32_0 = arith.constant 0 : i32
    return %c0_i32 : i32
  }
  func.func @transform_4(%arg0: i32) -> i32 {
    %c0_i32 = arith.constant 0 : i32
    %c0_i32_0 = arith.constant 0 : i32
    return %c0_i32 : i32
  }
  func.func @transform_5(%arg0: i32) -> (i32, i32, i32) {
    %c0_i32 = arith.constant 0 : i32
    %c0_i32_0 = arith.constant 0 : i32
    %c0_i32_1 = arith.constant 0 : i32
    return %arg0, %c0_i32, %c0_i32_0 : i32, i32, i32
  }
}

</mosaic_0001>

<llo_original>
// kernel: tpu_custom_call.1
$region0: #{tpu_custom_call.1}
  #allocation0 [shape = 'u32[]', space=smem, size = 0x4, offset = 0x4, fixed_abs, tag = 'smem constant byte address 0x4 - core index']
  #allocation1 [shape = 'u32[144,128]{1,0:T(1,128)}', space=vmem, size = 0x12000, scoped, tag = 'internal scratch']
  %s0 = inlined_call_operand.hbm [shape: f32[2,16,256], index: 0, kind: input, shape index: {}]
  %s1 = inlined_call_operand.hbm [shape: f32[5,1,256], index: 1, kind: input, shape index: {}]
  %s2 = inlined_call_operand.vmem [shape: f32[3], index: 2, kind: input, shape index: {}]
  %s3 = inlined_call_operand.vmem [shape: f32[25], index: 3, kind: input, shape index: {}]
  %s4 = inlined_call_operand.vmem [shape: f32[2], index: 4, kind: input, shape index: {}]
  %s5 = inlined_call_operand.hbm [shape: f32[2,16,256], index: 5, kind: output, shape index: {}]
  %s6 = sld [smem:[#allocation0]]
  $region73: #{tpu_custom_call.1} parent=0
    _
  %s8 = ssub.s32 1, %s6
  %s9 = scalar_select 0, %s8, %s6
  $region1: #{tpu_custom_call.1} parent=0
    #allocation2 [shape = 'u8[32768]{0}', space=vmem, size = 0x8000, scoped, tag = 'input window, operand 0']
    #allocation3 [shape = 's32[2]{0}', space=sflag, size = 0x8, scoped, tag = 'scoped memory for tpu_custom_call.1']
    #allocation4 [shape = 's32[2]{0}', space=sflag, size = 0x8, scoped, tag = 'scoped memory for tpu_custom_call.1']
    #allocation5 [shape = 's32[2]{0}', space=sflag, size = 0x8, scoped, tag = 'scoped memory for tpu_custom_call.1']
    #allocation6 [shape = 'u8[5120]{0}', space=vmem, size = 0x1400, scoped, tag = 'input window, operand 1, single buffered']
    #allocation7 [shape = 's32[1]{0}', space=sflag, size = 0x4, scoped, tag = 'scoped memory for tpu_custom_call.1']
    #allocation8 [shape = 'u8[512]{0}', space=smem, size = 0x200, scoped, tag = 'input window, operand 2, single buffered']
    #allocation9 [shape = 'u8[512]{0}', space=smem, size = 0x200, scoped, tag = 'input window, operand 3, single buffered']
    #allocation10 [shape = 's32[1]{0}', space=sflag, size = 0x4, scoped, tag = 'scoped memory for tpu_custom_call.1']
    #allocation11 [shape = 'u8[512]{0}', space=smem, size = 0x200, scoped, tag = 'input window, operand 4, single buffered']
    #allocation12 [shape = 'u8[32768]{0}', space=vmem, size = 0x8000, scoped, tag = 'output window, operand 0']
    %10 = vsyncpa [#allocation3], 0
    %s11 = scalar_lea.sflag [#allocation3], 1
    %12 = vsyncpa %s11, 0
    %13 = vsyncpa [#allocation7], 0
    %14 = vsyncpa [#allocation5], 0
    %15 = vsyncpa [#allocation10], 0
    %16 = vsyncpa [#allocation4], 0
    %s17 = scalar_lea.sflag [#allocation4], 1
    %18 = vsyncpa %s17, 0
    loop: start=0, step=1, limit=4
    $region2: #{tpu_custom_call.1} parent=1 // loop_pre_header
      _
    $region3: #{tpu_custom_call.1} parent=1 // loop_header
      %s20 = sphi 0, %s24
      %p21 = scmp.ge.s32.totalorder %s20, 4
      %s30 = sphi 0, %s32
      %s33 = sphi 0, %s30
      %s34 = sphi 0, %s33
      %s50 = sphi 0, %s34
      %s54 = sphi 0, %s54
      %s56 = sphi 0, %s54
      %s57 = sphi 0, %s56
      %s71 = sphi 0, %s57
      %s75 = sphi 0, %s75
      %s77 = sphi 0, %s75
      %s78 = sphi 0, %s77
      %s92 = sphi 0, %s78
      %s96 = sphi 0, %s96
      %s98 = sphi 0, %s96
      %s99 = sphi 0, %s98
      %s113 = sphi 0, %s99
      %s117 = sphi 0, %s117
      %s119 = sphi 0, %s117
      %s120 = sphi 0, %s119
      %s134 = sphi 0, %s120
      %s140 = sphi 0, %s142
      %s143 = sphi 0, %s140
      %s144 = sphi 0, %s143
      %s160 = sphi 0, %s144
    $region4: #{tpu_custom_call.1} parent=1 // loop_header_branch
      %23 = sbr.rel (%p21) target = $region8
    $region5: #{tpu_custom_call.1} parent=1 // loop_body
      %s25 = ssub.s32 %s20, 1
      %s26 = ssub.s32 %s20, 2
      %s27 = sadd.s32 %s20, 1
      %s28 = ssub.s32 %s20, %s27
      %p29 = scmp.eq.s32.totalorder %s28, 0
      %s31 = sadd.s32 %s30, 1
      %s32 = scalar_select %p29, %s30, %s31
      %p35 = pneg %p29
      %p36 = scmp.eq.s32.totalorder %s20, 1
      %p37 = por %p35, %p36
      %p38 = scmp.ne.s32.totalorder %s30, %s33
      %p39 = scmp.eq.s32.totalorder %s20, 0
      %p40 = por %p38, %p39
      %p41 = scmp.ne.s32.totalorder %s30, %s33
      %p42 = scmp.eq.s32.totalorder %s25, 1
      %p43 = por %p41, %p42
      %p44 = scmp.ne.s32.totalorder %s33, %s34
      %p45 = scmp.eq.s32.totalorder %s25, 0
      %p46 = por %p44, %p45
      %p47 = scmp.ne.s32.totalorder %s33, %s34
      %p48 = scmp.eq.s32.totalorder %s26, 1
      %p49 = por %p47, %p48
      %p51 = scmp.ne.s32.totalorder %s34, %s50
      %p52 = scmp.eq.s32.totalorder %s26, 0
      %p53 = por %p51, %p52
      %s55 = sadd.s32 %s54, 1
      %p58 = scmp.eq.s32.totalorder %s20, 1
      %p59 = scmp.ne.s32.totalorder %s54, %s56
      %p60 = scmp.eq.s32.totalorder %s20, 0
      %p61 = por %p59, %p60
      %p62 = scmp.ne.s32.totalorder %s54, %s56
      %p63 = scmp.eq.s32.totalorder %s25, 1
      %p64 = por %p62, %p63
      %p65 = scmp.ne.s32.totalorder %s56, %s57
      %p66 = scmp.eq.s32.totalorder %s25, 0
      %p67 = por %p65, %p66
      %p68 = scmp.ne.s32.totalorder %s56, %s57
      %p69 = scmp.eq.s32.totalorder %s26, 1
      %p70 = por %p68, %p69
      %p72 = scmp.ne.s32.totalorder %s57, %s71
      %p73 = scmp.eq.s32.totalorder %s26, 0
      %p74 = por %p72, %p73
      %s76 = sadd.s32 %s75, 1
      %p79 = scmp.eq.s32.totalorder %s20, 1
      %p80 = scmp.ne.s32.totalorder %s75, %s77
      %p81 = scmp.eq.s32.totalorder %s20, 0
      %p82 = por %p80, %p81
      %p83 = scmp.ne.s32.totalorder %s75, %s77
      %p84 = scmp.eq.s32.totalorder %s25, 1
      %p85 = por %p83, %p84
      %p86 = scmp.ne.s32.totalorder %s77, %s78
      %p87 = scmp.eq.s32.totalorder %s25, 0
      %p88 = por %p86, %p87
      %p89 = scmp.ne.s32.totalorder %s77, %s78
      %p90 = scmp.eq.s32.totalorder %s26, 1
      %p91 = por %p89, %p90
      %p93 = scmp.ne.s32.totalorder %s78, %s92
      %p94 = scmp.eq.s32.totalorder %s26, 0
      %p95 = por %p93, %p94
      %s97 = sadd.s32 %s96, 1
      %p100 = scmp.eq.s32.totalorder %s20, 1
      %p101 = scmp.ne.s32.totalorder %s96, %s98
      %p102 = scmp.eq.s32.totalorder %s20, 0
      %p103 = por %p101, %p102
      %p104 = scmp.ne.s32.totalorder %s96, %s98
      %p105 = scmp.eq.s32.totalorder %s25, 1
      %p106 = por %p104, %p105
      %p107 = scmp.ne.s32.totalorder %s98, %s99
      %p108 = scmp.eq.s32.totalorder %s25, 0
      %p109 = por %p107, %p108
      %p110 = scmp.ne.s32.totalorder %s98, %s99
      %p111 = scmp.eq.s32.totalorder %s26, 1
      %p112 = por %p110, %p111
      %p114 = scmp.ne.s32.totalorder %s99, %s113
      %p115 = scmp.eq.s32.totalorder %s26, 0
      %p116 = por %p114, %p115
      %s118 = sadd.s32 %s117, 1
      %p121 = scmp.eq.s32.totalorder %s20, 1
      %p122 = scmp.ne.s32.totalorder %s117, %s119
      %p123 = scmp.eq.s32.totalorder %s20, 0
      %p124 = por %p122, %p123
      %p125 = scmp.ne.s32.totalorder %s117, %s119
      %p126 = scmp.eq.s32.totalorder %s25, 1
      %p127 = por %p125, %p126
      %p128 = scmp.ne.s32.totalorder %s119, %s120
      %p129 = scmp.eq.s32.totalorder %s25, 0
      %p130 = por %p128, %p129
      %p131 = scmp.ne.s32.totalorder %s119, %s120
      %p132 = scmp.eq.s32.totalorder %s26, 1
      %p133 = por %p131, %p132
      %p135 = scmp.ne.s32.totalorder %s120, %s134
      %p136 = scmp.eq.s32.totalorder %s26, 0
      %p137 = por %p135, %p136
      %s138 = ssub.s32 %s20, %s27
      %p139 = scmp.eq.s32.totalorder %s138, 0
      %s141 = sadd.s32 %s140, 1
      %s142 = scalar_select %p139, %s140, %s141
      %p145 = pneg %p139
      %p146 = scmp.eq.s32.totalorder %s20, 1
      %p147 = por %p145, %p146
      %p148 = scmp.ne.s32.totalorder %s140, %s143
      %p149 = scmp.eq.s32.totalorder %s20, 0
      %p150 = por %p148, %p149
      %p151 = scmp.ne.s32.totalorder %s140, %s143
      %p152 = scmp.eq.s32.totalorder %s25, 1
      %p153 = por %p151, %p152
      %p154 = scmp.ne.s32.totalorder %s143, %s144
      %p155 = scmp.eq.s32.totalorder %s25, 0
      %p156 = por %p154, %p155
      %p157 = scmp.ne.s32.totalorder %s143, %s144
      %p158 = scmp.eq.s32.totalorder %s26, 1
      %p159 = por %p157, %p158
      %p161 = scmp.ne.s32.totalorder %s144, %s160
      %p162 = scmp.eq.s32.totalorder %s26, 0
      %p163 = por %p161, %p162
      %p164 = scmp.le.s32.totalorder 1, %s20
      %p165 = scmp.lt.s32.totalorder %s20, 3
      %p166 = pnand %p164, %p165
      %p167 = pneg %p166
      // Predicated region
      $region9: #{tpu_custom_call.1} parent=5 // pred_check
        _
      $region10: #{tpu_custom_call.1} parent=5 // pred_check_branch
        %169 = sbr.rel (%p166) target = $region12
      $region11: #{tpu_custom_call.1} parent=5 // pred_region
        %s170 = ssub.s32 %s20, 1
        // Predicated region
        $region13: #{tpu_custom_call.1} parent=11 // pred_check
          %p171 = pneg %p67
        $region14: #{tpu_custom_call.1} parent=11 // pred_check_branch
          %173 = sbr.rel (%p171) target = $region16
        $region15: #{tpu_custom_call.1} parent=11 // pred_region
          %s175 = ssub.s32 160, 160
          %176 = vsyncadd [#allocation7], %s175
          %s177 = sshll.u32 [#allocation6], 4
          %s178 = int_to_ptr.vmem [resolvable:$true] %s177
          %183 = dma.hbm_to_vmem [thread:$0]  %s1, 160, %s178, [#allocation7], 32, 32, 2
        $region16: #{tpu_custom_call.1} parent=11 // pred_fallthru
          _
        // Predicated region
        $region17: #{tpu_custom_call.1} parent=11 // pred_check
          %p184 = pneg %p88
        $region18: #{tpu_custom_call.1} parent=11 // pred_check_branch
          %186 = sbr.rel (%p184) target = $region20
        $region19: #{tpu_custom_call.1} parent=11 // pred_region
          %s188 = ssub.s32 16, 16
          %189 = vsyncadd [#allocation5], %s188
          %s191 = sshll.u32 %s2, 4
          %s192 = int_to_ptr.vmem [resolvable:$true] %s191
          %194 = dma.vmem_to_smem %s192, 16, [#allocation8], [#allocation5]
        $region20: #{tpu_custom_call.1} parent=11 // pred_fallthru
          _
        // Predicated region
        $region21: #{tpu_custom_call.1} parent=11 // pred_check
          %p195 = pneg %p109
        $region22: #{tpu_custom_call.1} parent=11 // pred_check_branch
          %197 = sbr.rel (%p195) target = $region24
        $region23: #{tpu_custom_call.1} parent=11 // pred_region
          %s199 = ssub.s32 16, 16
          %200 = vsyncadd [#allocation10], %s199
          %s202 = sshll.u32 %s3, 4
          %s203 = int_to_ptr.vmem [resolvable:$true] %s202
          %205 = dma.vmem_to_smem %s203, 16, [#allocation9], [#allocation10]
        $region24: #{tpu_custom_call.1} parent=11 // pred_fallthru
          _
        // Predicated region
        $region25: #{tpu_custom_call.1} parent=11 // pred_check
          %p206 = pneg %p130
        $region26: #{tpu_custom_call.1} parent=11 // pred_check_branch
          %208 = sbr.rel (%p206) target = $region28
        $region27: #{tpu_custom_call.1} parent=11 // pred_region
          %s210 = ssub.s32 16, 16
          %211 = vsyncadd [#allocation10], %s210
          %s213 = sshll.u32 %s4, 4
          %s214 = int_to_ptr.vmem [resolvable:$true] %s213
          %216 = dma.vmem_to_smem %s214, 16, [#allocation11], [#allocation10]
        $region28: #{tpu_custom_call.1} parent=11 // pred_fallthru
          _
      $region12: #{tpu_custom_call.1} parent=5 // pred_fallthru
        _
      %p217 = scmp.lt.s32.totalorder %s20, 2
      // Predicated region
      $region29: #{tpu_custom_call.1} parent=5 // pred_check
        %p218 = pneg %p217
      $region30: #{tpu_custom_call.1} parent=5 // pred_check_branch
        %220 = sbr.rel (%p218) target = $region32
      $region31: #{tpu_custom_call.1} parent=5 // pred_region
        // Predicated region
        $region33: #{tpu_custom_call.1} parent=31 // pred_check
          %p221 = pneg %p40
        $region34: #{tpu_custom_call.1} parent=31 // pred_check_branch
          %223 = sbr.rel (%p221) target = $region36
        $region35: #{tpu_custom_call.1} parent=31 // pred_region
          %s224 = sand.u32 %s30, 1
          %s225 = scalar_lea.sflag [#allocation3], %s224
          %s226 = sand.u32 %s30, 1
          %s227 = smul.addr %s226, 32
          %s228 = scalar_lea.vmem [#allocation2], %s227
          %s230 = ssub.s32 512, 512
          %231 = vsyncadd %s225, %s230
          %s232 = smul.addr %s20, 4
          %s233 = smul.addr %s232, 128
          %s234 = scalar_lea.hbm %s0, %s233
          %s235 = sshll.u32 %s228, 4
          %s236 = int_to_ptr.vmem [resolvable:$true] %s235
          %241 = dma.hbm_to_vmem [thread:$0]  %s234, 512, %s236, %s225, 256, 256, 16
        $region36: #{tpu_custom_call.1} parent=31 // pred_fallthru
          _
      $region32: #{tpu_custom_call.1} parent=5 // pred_fallthru
        _
      %p242 = scmp.le.s32.totalorder 1, %s20
      %p243 = scmp.lt.s32.totalorder %s20, 3
      %p244 = pnand %p242, %p243
      %p245 = pneg %p244
      // Predicated region
      $region37: #{tpu_custom_call.1} parent=5 // pred_check
        _
      $region38: #{tpu_custom_call.1} parent=5 // pred_check_branch
        %247 = sbr.rel (%p244) target = $region40
      $region39: #{tpu_custom_call.1} parent=5 // pred_region
        %s248 = ssub.s32 %s20, 1
        %s249 = sand.u32 %s33, 1
        %s250 = scalar_lea.sflag [#allocation3], %s249
        %s251 = sand.u32 %s33, 1
        %s252 = smul.addr %s251, 32
        %s253 = scalar_lea.vmem [#allocation2], %s252
        // Predicated region
        $region41: #{tpu_custom_call.1} parent=39 // pred_check
          %p254 = pneg %p46
        $region42: #{tpu_custom_call.1} parent=39 // pred_check_branch
          %256 = sbr.rel (%p254) target = $region44
        $region43: #{tpu_custom_call.1} parent=39 // pred_region
          %257 = dma.done %s250, 512
        $region44: #{tpu_custom_call.1} parent=39 // pred_fallthru
          _
        // Predicated region
        $region45: #{tpu_custom_call.1} parent=39 // pred_check
          %p258 = pneg %p67
        $region46: #{tpu_custom_call.1} parent=39 // pred_check_branch
          %260 = sbr.rel (%p258) target = $region48
        $region47: #{tpu_custom_call.1} parent=39 // pred_region
          %261 = dma.done [#allocation7], 160
        $region48: #{tpu_custom_call.1} parent=39 // pred_fallthru
          _
        // Predicated region
        $region49: #{tpu_custom_call.1} parent=39 // pred_check
          %p262 = pneg %p88
        $region50: #{tpu_custom_call.1} parent=39 // pred_check_branch
          %264 = sbr.rel (%p262) target = $region52
        $region51: #{tpu_custom_call.1} parent=39 // pred_region
          %265 = dma.done [#allocation5], 16
        $region52: #{tpu_custom_call.1} parent=39 // pred_fallthru
          _
        // Predicated region
        $region53: #{tpu_custom_call.1} parent=39 // pred_check
          %p266 = pneg %p109
        $region54: #{tpu_custom_call.1} parent=39 // pred_check_branch
          %268 = sbr.rel (%p266) target = $region56
        $region55: #{tpu_custom_call.1} parent=39 // pred_region
          %269 = dma.done [#allocation10], 16
        $region56: #{tpu_custom_call.1} parent=39 // pred_fallthru
          _
        // Predicated region
        $region57: #{tpu_custom_call.1} parent=39 // pred_check
          %p270 = pneg %p130
        $region58: #{tpu_custom_call.1} parent=39 // pred_check_branch
          %272 = sbr.rel (%p270) target = $region60
        $region59: #{tpu_custom_call.1} parent=39 // pred_region
          %273 = dma.done [#allocation10], 16
        $region60: #{tpu_custom_call.1} parent=39 // pred_fallthru
          _
        %274 = sfence
        %s275 = sand.u32 %s33, 1
        %s276 = scalar_lea.sflag [#allocation3], %s275
        %s277 = sand.u32 %s33, 1
        %s278 = smul.addr %s277, 32
        %s279 = scalar_lea.vmem [#allocation2], %s278
        %p280 = pneg %p46
        %p281 = pneg %p43
        %p282 = pneg %p67
        %p283 = pneg %p64
        %p284 = pneg %p88
        %p285 = pneg %p85
        %p286 = pneg %p109
        %p287 = pneg %p106
        %p288 = pneg %p130
        %p289 = pneg %p127
        %p290 = pneg %p156
        %p291 = pneg %p153
        %s292 = sand.u32 %s143, 1
        %s293 = scalar_lea.sflag [#allocation4], %s292
        %s294 = sand.u32 %s143, 1
        %s295 = smul.addr %s294, 32
        %s296 = scalar_lea.vmem [#allocation12], %s295
        %v297 = vld [vmem:[%s253] sm:$0xff]
        %v298 = vld [vmem:[%s253 + $0x8] sm:$0xff]
        %v299 = vld [vmem:[%s253 + $0x10] sm:$0xff]
        %v300 = vld [vmem:[%s253 + $0x18] sm:$0xff]
        %v301 = vadd.f32 %v297, %v298
        %302 = vadd.xlane.f32.xlu0 %v301
        %v303 = vpop.xlane.xlu0 %302
        %v304 = vadd.f32 %v299, %v300
        %305 = vadd.xlane.f32.xlu0 %v304
        %v306 = vpop.xlane.xlu0 %305
        %v307 = vmul.f32 %v303, 0.00390625
        %v308 = vmul.f32 %v306, 0.00390625
        %v309 = vmax.f32 %v297, %v298
        %310 = vmax.xlane.f32.xlu0 %v309
        %v311 = vpop.xlane.xlu0 %310
        %v312 = vmax.f32 %v299, %v300
        %313 = vmax.xlane.f32.xlu0 %v312
        %v314 = vpop.xlane.xlu0 %313
        %vm315 = vcmask 7168
        %v316 = vsel %vm315, %v307, %v311
        %v317 = vsel %vm315, %v308, %v314
        %vm320 = vcmask 1040384
        %v321 = vrot.slane %v316, 7
        %v322 = vrot.slane %v317, 7
        %v323 = vsel %vm320, %v321, %v322
        %v327 = vsel %vm320, 0.0, %v321
        %v328 = vsel %vm320, %v322, 0.0
        %s329 = sld [smem:[#allocation8]]
        %v330 = vstv %s329
        %v331 = vmul.f32 %v330, %v327
        %v332 = vmul.f32 %v330, %v323
        %s333 = sld [smem:[#allocation8 + $0x1]]
        %v334 = vstv %s333
        %v335 = vmul.f32 %v334, %v327
        %v336 = vmul.f32 %v334, %v323
        %v337 = vmul.f32 %v334, %v328
        %vm341 = vcmask 1046528
        %v342 = vrot.slane %v335, 1
        %v343 = vrot.slane %v336, 1
        %v344 = vsel %vm341, %v342, %v343
        %v345 = vrot.slane %v337, 1
        %v346 = vsel %vm341, %v343, %v345
        %v349 = vadd.f32 %v331, %v344
        %v350 = vadd.f32 %v332, %v346
        %s351 = sld [smem:[#allocation8 + $0x2]]
        %v352 = vstv %s351
        %v353 = vmul.f32 %v352, %v327
        %v354 = vmul.f32 %v352, %v323
        %v355 = vmul.f32 %v352, %v328
        %vm359 = vcmask 1045504
        %v360 = vrot.slane %v353, 2
        %v361 = vrot.slane %v354, 2
        %v362 = vsel %vm359, %v360, %v361
        %v363 = vrot.slane %v355, 2
        %v364 = vsel %vm359, %v361, %v363
        %v367 = vadd.f32 %v349, %v362
        %v368 = vadd.f32 %v350, %v364
        %371 = vrot.lane.b32.xlu0 %v367, 127
        %v372 = vpop.permute.xlu0 %371
        %373 = vrot.lane.b32.xlu0 %v368, 127
        %v374 = vpop.permute.xlu0 %373
        %v377 = vadd.f32 %v367, %v372
        %v378 = vadd.f32 %v368, %v374
        %v379 = vxor.u32 %v377, 2147483648
        %v380 = vxor.u32 %v378, 2147483648
        %v381 = vmul.f32 %v379, 1.442695
        %v382 = vpow.pop %v381
        %v383 = vmul.f32 %v380, 1.442695
        %v384 = vpow.pop %v383
        %v385 = vadd.f32 %v382, 1.0
        %v386 = vadd.f32 %v384, 1.0
        %v387 = vrcp.pop %v385
        %v388 = vmul.f32 1.0, %v387
        %v389 = vrcp.pop %v386
        %v390 = vmul.f32 1.0, %v389
        %392 = vset.pattern.permute.xlu0 0
        %393 = vperm.xlu0 %392, %v388
        %v394 = vpop.permute.xlu0 %393
        %397 = vset.pattern.permute.xlu0 0
        %398 = vperm.xlu0 %397, %v390
        %v399 = vpop.permute.xlu0 %398
        %v401 = vmul.f32 %v297, %v394
        %v402 = vmul.f32 %v298, %v394
        %v403 = vmul.f32 %v299, %v399
        %v404 = vmul.f32 %v300, %v399
        %v405 = vmax.f32 %v401, %v403
        %v406 = vrot.slane %v405, 4
        %v407 = vmax.f32 %v405, %v406
        %v408 = vrot.slane %v407, 2
        %v409 = vmax.f32 %v407, %v408
        %v410 = vrot.slane %v409, 1
        %v411 = vmax.f32 %v409, %v410
        %v412 = vmax.f32 %v402, %v404
        %v413 = vrot.slane %v412, 4
        %v414 = vmax.f32 %v412, %v413
        %v415 = vrot.slane %v414, 2
        %v416 = vmax.f32 %v414, %v415
        %v417 = vrot.slane %v416, 1
        %v418 = vmax.f32 %v416, %v417
        %v419 = vadd.f32 %v401, %v403
        %v420 = vrot.slane %v419, 4
        %v421 = vadd.f32 %v419, %v420
        %v422 = vrot.slane %v421, 2
        %v423 = vadd.f32 %v421, %v422
        %v424 = vrot.slane %v423, 1
        %v425 = vadd.f32 %v423, %v424
        %v426 = vadd.f32 %v402, %v404
        %v427 = vrot.slane %v426, 4
        %v428 = vadd.f32 %v426, %v427
        %v429 = vrot.slane %v428, 2
        %v430 = vadd.f32 %v428, %v429
        %v431 = vrot.slane %v430, 1
        %v432 = vadd.f32 %v430, %v431
        %v433 = vadd.f32 %v425, 0.0
        %v434 = vadd.f32 %v432, 0.0
        %v435 = vmul.f32 %v433, 0.0625
        %v436 = vmul.f32 %v434, 0.0625
        %v437 = vsel %vm320, %v411, %v435
        %v438 = vsel %vm320, %v418, %v436
        %441 = vrot.lane.b32.xlu0 %v437, 34
        %v442 = vpop.permute.xlu0 %441
        %443 = vrot.lane.b32.xlu0 %v438, 34
        %v444 = vpop.permute.xlu0 %443
        %vm445 = vcmask 277504
        %v446 = vsel %vm445, %v442, %v444
        %v450 = vsel %vm445, 0.0, %v442
        %v451 = vsel %vm445, %v444, 0.0
        %v452 = vld [vmem:[#allocation6] sm:$0x3]
        %v453 = vld [vmem:[#allocation6 + $0x2] sm:$0x3]
        %v454 = vld [vmem:[#allocation6 + $0x4] sm:$0x3]
        %v455 = vld [vmem:[#allocation6 + $0x6] sm:$0x3]
        %v456 = vld [vmem:[#allocation6 + $0x8] sm:$0x3]
        %s457 = sld [smem:[#allocation9]]
        %v458 = vstv %s457
        %v459 = vmul.f32 %v458, %v450
        %v460 = vmul.f32 %v458, %v446
        %v461 = vadd.f32 %v459, 0.0
        %v462 = vadd.f32 %v460, 0.0
        %s463 = sld [smem:[#allocation9 + $0x5]]
        %v464 = vstv %s463
        %v465 = vmul.f32 %v464, %v450
        %v466 = vmul.f32 %v464, %v446
        %v467 = vmul.f32 %v464, %v451
        %471 = vrot.lane.b32.xlu0 %v465, 112
        %v472 = vpop.permute.xlu0 %471
        %473 = vrot.lane.b32.xlu0 %v466, 112
        %v474 = vpop.permute.xlu0 %473
        %475 = vrot.lane.b32.xlu0 %v467, 112
        %v476 = vpop.permute.xlu0 %475
        %vm477 = vcmask 916480
        %v478 = vsel %vm477, %v472, %v474
        %v479 = vsel %vm477, %v474, %v476
        %v482 = vadd.f32 %v461, %v478
        %v483 = vadd.f32 %v462, %v479
        %s484 = sld [smem:[#allocation9 + $0xa]]
        %v485 = vstv %s484
        %v486 = vmul.f32 %v485, %v450
        %v487 = vmul.f32 %v485, %v446
        %v488 = vmul.f32 %v485, %v451
        %492 = vrot.lane.b32.xlu0 %v486, 96
        %v493 = vpop.permute.xlu0 %492
        %494 = vrot.lane.b32.xlu0 %v487, 96
        %v495 = vpop.permute.xlu0 %494
        %496 = vrot.lane.b32.xlu0 %v488, 96
        %v497 = vpop.permute.xlu0 %496
        %vm498 = vcmask 785408
        %v499 = vsel %vm498, %v493, %v495
        %v500 = vsel %vm498, %v495, %v497
        %v503 = vadd.f32 %v482, %v499
        %v504 = vadd.f32 %v483, %v500
        %s505 = sld [smem:[#allocation9 + $0xf]]
        %v506 = vstv %s505
        %v507 = vmul.f32 %v506, %v450
        %v508 = vmul.f32 %v506, %v446
        %v509 = vmul.f32 %v506, %v451
        %513 = vrot.lane.b32.xlu0 %v507, 80
        %v514 = vpop.permute.xlu0 %513
        %515 = vrot.lane.b32.xlu0 %v508, 80
        %v516 = vpop.permute.xlu0 %515
        %517 = vrot.lane.b32.xlu0 %v509, 80
        %v518 = vpop.permute.xlu0 %517
        %vm519 = vcmask 654336
        %v520 = vsel %vm519, %v514, %v516
        %v521 = vsel %vm519, %v516, %v518
        %v524 = vadd.f32 %v503, %v520
        %v525 = vadd.f32 %v504, %v521
        %s526 = sld [smem:[#allocation9 + $0x14]]
        %v527 = vstv %s526
        %v528 = vmul.f32 %v527, %v450
        %v529 = vmul.f32 %v527, %v446
        %v530 = vmul.f32 %v527, %v451
        %534 = vrot.lane.b32.xlu0 %v528, 64
        %v535 = vpop.permute.xlu0 %534
        %536 = vrot.lane.b32.xlu0 %v529, 64
        %v537 = vpop.permute.xlu0 %536
        %538 = vrot.lane.b32.xlu0 %v530, 64
        %v539 = vpop.permute.xlu0 %538
        %vm540 = vcmask 523264
        %v541 = vsel %vm540, %v535, %v537
        %v542 = vsel %vm540, %v537, %v539
        %v545 = vadd.f32 %v524, %v541
        %v546 = vadd.f32 %v525, %v542
        %v548 = vlaneseq
        %v549 = vshrl.u32 %v548, 7
        %v550 = vsub.s32 0, %v549
        %v551 = vrot.slane %v452, %v550
        %v552 = vlaneseq
        %v553 = vshrl.u32 %v552, 7
        %v554 = vsub.s32 1, %v553
        %v555 = vrot.slane %v452, %v554
        %v558 = vmul.f32 %v545, %v551
        %v559 = vmul.f32 %v546, %v555
        %v560 = vadd.f32 %v558, 0.0
        %v561 = vadd.f32 %v559, 0.0
        %s562 = sld [smem:[#allocation9 + $0x1]]
        %v563 = vstv %s562
        %v564 = vmul.f32 %v563, %v450
        %v565 = vmul.f32 %v563, %v446
        %v566 = vmul.f32 %v563, %v451
        %v567 = vadd.f32 %v564, 0.0
        %v568 = vadd.f32 %v565, 0.0
        %v569 = vadd.f32 %v566, 0.0
        %s570 = sld [smem:[#allocation9 + $0x6]]
        %v571 = vstv %s570
        %v572 = vmul.f32 %v571, %v450
        %v573 = vmul.f32 %v571, %v446
        %v574 = vmul.f32 %v571, %v451
        %578 = vrot.lane.b32.xlu0 %v572, 112
        %v579 = vpop.permute.xlu0 %578
        %580 = vrot.lane.b32.xlu0 %v573, 112
        %v581 = vpop.permute.xlu0 %580
        %582 = vrot.lane.b32.xlu0 %v574, 112
        %v583 = vpop.permute.xlu0 %582
        %v584 = vsel %vm477, %v579, %v581
        %v585 = vsel %vm477, %v581, %v583
        %v589 = vadd.f32 %v567, %v584
        %v590 = vadd.f32 %v568, %v585
        %v591 = vadd.f32 %v569, %v583
        %s592 = sld [smem:[#allocation9 + $0xb]]
        %v593 = vstv %s592
        %v594 = vmul.f32 %v593, %v450
        %v595 = vmul.f32 %v593, %v446
        %v596 = vmul.f32 %v593, %v451
        %600 = vrot.lane.b32.xlu0 %v594, 96
        %v601 = vpop.permute.xlu0 %600
        %602 = vrot.lane.b32.xlu0 %v595, 96
        %v603 = vpop.permute.xlu0 %602
        %604 = vrot.lane.b32.xlu0 %v596, 96
        %v605 = vpop.permute.xlu0 %604
        %v606 = vsel %vm498, %v601, %v603
        %v607 = vsel %vm498, %v603, %v605
        %v611 = vadd.f32 %v589, %v606
        %v612 = vadd.f32 %v590, %v607
        %v613 = vadd.f32 %v591, %v605
        %s614 = sld [smem:[#allocation9 + $0x10]]
        %v615 = vstv %s614
        %v616 = vmul.f32 %v615, %v450
        %v617 = vmul.f32 %v615, %v446
        %v618 = vmul.f32 %v615, %v451
        %622 = vrot.lane.b32.xlu0 %v616, 80
        %v623 = vpop.permute.xlu0 %622
        %624 = vrot.lane.b32.xlu0 %v617, 80
        %v625 = vpop.permute.xlu0 %624
        %626 = vrot.lane.b32.xlu0 %v618, 80
        %v627 = vpop.permute.xlu0 %626
        %v628 = vsel %vm519, %v623, %v625
        %v629 = vsel %vm519, %v625, %v627
        %v633 = vadd.f32 %v611, %v628
        %v634 = vadd.f32 %v612, %v629
        %v635 = vadd.f32 %v613, %v627
        %s636 = sld [smem:[#allocation9 + $0x15]]
        %v637 = vstv %s636
        %v638 = vmul.f32 %v637, %v450
        %v639 = vmul.f32 %v637, %v446
        %v640 = vmul.f32 %v637, %v451
        %644 = vrot.lane.b32.xlu0 %v638, 64
        %v645 = vpop.permute.xlu0 %644
        %646 = vrot.lane.b32.xlu0 %v639, 64
        %v647 = vpop.permute.xlu0 %646
        %648 = vrot.lane.b32.xlu0 %v640, 64
        %v649 = vpop.permute.xlu0 %648
        %v650 = vsel %vm540, %v645, %v647
        %v651 = vsel %vm540, %v647, %v649
        %v655 = vadd.f32 %v633, %v650
        %v656 = vadd.f32 %v634, %v651
        %v657 = vadd.f32 %v635, %v649
        %v659 = vlaneseq
        %v660 = vshrl.u32 %v659, 7
        %v661 = vsub.s32 0, %v660
        %v662 = vrot.slane %v453, %v661
        %v663 = vlaneseq
        %v664 = vshrl.u32 %v663, 7
        %v665 = vsub.s32 1, %v664
        %v666 = vrot.slane %v453, %v665
        %667 = vrot.lane.b32.xlu0 %v662, 1
        %v668 = vpop.permute.xlu0 %667
        %669 = vrot.lane.b32.xlu0 %v666, 1
        %v670 = vpop.permute.xlu0 %669
        %v671 = vsel %vm315, %v668, %v670
        %v675 = vmul.f32 %v655, %v668
        %v676 = vmul.f32 %v656, %v671
        %v677 = vmul.f32 %v657, %v670
        %681 = vrot.lane.b32.xlu0 %v675, 127
        %v682 = vpop.permute.xlu0 %681
        %683 = vrot.lane.b32.xlu0 %v676, 127
        %v684 = vpop.permute.xlu0 %683
        %685 = vrot.lane.b32.xlu0 %v677, 127
        %v686 = vpop.permute.xlu0 %685
        %vm687 = vcmask 1039360
        %v688 = vsel %vm687, %v682, %v684
        %v689 = vsel %vm687, %v684, %v686
        %v692 = vadd.f32 %v560, %v688
        %v693 = vadd.f32 %v561, %v689
        %s694 = sld [smem:[#allocation9 + $0x2]]
        %v695 = vstv %s694
        %v696 = vmul.f32 %v695, %v450
        %v697 = vmul.f32 %v695, %v446
        %v698 = vmul.f32 %v695, %v451
        %v699 = vadd.f32 %v696, 0.0
        %v700 = vadd.f32 %v697, 0.0
        %v701 = vadd.f32 %v698, 0.0
        %s702 = sld [smem:[#allocation9 + $0x7]]
        %v703 = vstv %s702
        %v704 = vmul.f32 %v703, %v450
        %v705 = vmul.f32 %v703, %v446
        %v706 = vmul.f32 %v703, %v451
        %710 = vrot.lane.b32.xlu0 %v704, 112
        %v711 = vpop.permute.xlu0 %710
        %712 = vrot.lane.b32.xlu0 %v705, 112
        %v713 = vpop.permute.xlu0 %712
        %714 = vrot.lane.b32.xlu0 %v706, 112
        %v715 = vpop.permute.xlu0 %714
        %v716 = vsel %vm477, %v711, %v713
        %v717 = vsel %vm477, %v713, %v715
        %v721 = vadd.f32 %v699, %v716
        %v722 = vadd.f32 %v700, %v717
        %v723 = vadd.f32 %v701, %v715
        %s724 = sld [smem:[#allocation9 + $0xc]]
        %v725 = vstv %s724
        %v726 = vmul.f32 %v725, %v450
        %v727 = vmul.f32 %v725, %v446
        %v728 = vmul.f32 %v725, %v451
        %732 = vrot.lane.b32.xlu0 %v726, 96
        %v733 = vpop.permute.xlu0 %732
        %734 = vrot.lane.b32.xlu0 %v727, 96
        %v735 = vpop.permute.xlu0 %734
        %736 = vrot.lane.b32.xlu0 %v728, 96
        %v737 = vpop.permute.xlu0 %736
        %v738 = vsel %vm498, %v733, %v735
        %v739 = vsel %vm498, %v735, %v737
        %v743 = vadd.f32 %v721, %v738
        %v744 = vadd.f32 %v722, %v739
        %v745 = vadd.f32 %v723, %v737
        %s746 = sld [smem:[#allocation9 + $0x11]]
        %v747 = vstv %s746
        %v748 = vmul.f32 %v747, %v450
        %v749 = vmul.f32 %v747, %v446
        %v750 = vmul.f32 %v747, %v451
        %754 = vrot.lane.b32.xlu0 %v748, 80
        %v755 = vpop.permute.xlu0 %754
        %756 = vrot.lane.b32.xlu0 %v749, 80
        %v757 = vpop.permute.xlu0 %756
        %758 = vrot.lane.b32.xlu0 %v750, 80
        %v759 = vpop.permute.xlu0 %758
        %v760 = vsel %vm519, %v755, %v757
        %v761 = vsel %vm519, %v757, %v759
        %v765 = vadd.f32 %v743, %v760
        %v766 = vadd.f32 %v744, %v761
        %v767 = vadd.f32 %v745, %v759
        %s768 = sld [smem:[#allocation9 + $0x16]]
        %v769 = vstv %s768
        %v770 = vmul.f32 %v769, %v450
        %v771 = vmul.f32 %v769, %v446
        %v772 = vmul.f32 %v769, %v451
        %776 = vrot.lane.b32.xlu0 %v770, 64
        %v777 = vpop.permute.xlu0 %776
        %778 = vrot.lane.b32.xlu0 %v771, 64
        %v779 = vpop.permute.xlu0 %778
        %780 = vrot.lane.b32.xlu0 %v772, 64
        %v781 = vpop.permute.xlu0 %780
        %v782 = vsel %vm540, %v777, %v779
        %v783 = vsel %vm540, %v779, %v781
        %v787 = vadd.f32 %v765, %v782
        %v788 = vadd.f32 %v766, %v783
        %v789 = vadd.f32 %v767, %v781
        %v791 = vlaneseq
        %v792 = vshrl.u32 %v791, 7
        %v793 = vsub.s32 0, %v792
        %v794 = vrot.slane %v454, %v793
        %v795 = vlaneseq
        %v796 = vshrl.u32 %v795, 7
        %v797 = vsub.s32 1, %v796
        %v798 = vrot.slane %v454, %v797
        %799 = vrot.lane.b32.xlu0 %v794, 2
        %v800 = vpop.permute.xlu0 %799
        %801 = vrot.lane.b32.xlu0 %v798, 2
        %v802 = vpop.permute.xlu0 %801
        %vm803 = vcmask 15360
        %v804 = vsel %vm803, %v800, %v802
        %v808 = vmul.f32 %v787, %v800
        %v809 = vmul.f32 %v788, %v804
        %v810 = vmul.f32 %v789, %v802
        %814 = vrot.lane.b32.xlu0 %v808, 126
        %v815 = vpop.permute.xlu0 %814
        %816 = vrot.lane.b32.xlu0 %v809, 126
        %v817 = vpop.permute.xlu0 %816
        %818 = vrot.lane.b32.xlu0 %v810, 126
        %v819 = vpop.permute.xlu0 %818
        %vm820 = vcmask 1031168
        %v821 = vsel %vm820, %v815, %v817
        %v822 = vsel %vm820, %v817, %v819
        %v825 = vadd.f32 %v692, %v821
        %v826 = vadd.f32 %v693, %v822
        %s827 = sld [smem:[#allocation9 + $0x3]]
        %v828 = vstv %s827
        %v829 = vmul.f32 %v828, %v450
        %v830 = vmul.f32 %v828, %v446
        %v831 = vmul.f32 %v828, %v451
        %v832 = vadd.f32 %v829, 0.0
        %v833 = vadd.f32 %v830, 0.0
        %v834 = vadd.f32 %v831, 0.0
        %s835 = sld [smem:[#allocation9 + $0x8]]
        %v836 = vstv %s835
        %v837 = vmul.f32 %v836, %v450
        %v838 = vmul.f32 %v836, %v446
        %v839 = vmul.f32 %v836, %v451
        %843 = vrot.lane.b32.xlu0 %v837, 112
        %v844 = vpop.permute.xlu0 %843
        %845 = vrot.lane.b32.xlu0 %v838, 112
        %v846 = vpop.permute.xlu0 %845
        %847 = vrot.lane.b32.xlu0 %v839, 112
        %v848 = vpop.permute.xlu0 %847
        %v849 = vsel %vm477, %v844, %v846
        %v850 = vsel %vm477, %v846, %v848
        %v854 = vadd.f32 %v832, %v849
        %v855 = vadd.f32 %v833, %v850
        %v856 = vadd.f32 %v834, %v848
        %s857 = sld [smem:[#allocation9 + $0xd]]
        %v858 = vstv %s857
        %v859 = vmul.f32 %v858, %v450
        %v860 = vmul.f32 %v858, %v446
        %v861 = vmul.f32 %v858, %v451
        %865 = vrot.lane.b32.xlu0 %v859, 96
        %v866 = vpop.permute.xlu0 %865
        %867 = vrot.lane.b32.xlu0 %v860, 96
        %v868 = vpop.permute.xlu0 %867
        %869 = vrot.lane.b32.xlu0 %v861, 96
        %v870 = vpop.permute.xlu0 %869
        %v871 = vsel %vm498, %v866, %v868
        %v872 = vsel %vm498, %v868, %v870
        %v876 = vadd.f32 %v854, %v871
        %v877 = vadd.f32 %v855, %v872
        %v878 = vadd.f32 %v856, %v870
        %s879 = sld [smem:[#allocation9 + $0x12]]
        %v880 = vstv %s879
        %v881 = vmul.f32 %v880, %v450
        %v882 = vmul.f32 %v880, %v446
        %v883 = vmul.f32 %v880, %v451
        %887 = vrot.lane.b32.xlu0 %v881, 80
        %v888 = vpop.permute.xlu0 %887
        %889 = vrot.lane.b32.xlu0 %v882, 80
        %v890 = vpop.permute.xlu0 %889
        %891 = vrot.lane.b32.xlu0 %v883, 80
        %v892 = vpop.permute.xlu0 %891
        %v893 = vsel %vm519, %v888, %v890
        %v894 = vsel %vm519, %v890, %v892
        %v898 = vadd.f32 %v876, %v893
        %v899 = vadd.f32 %v877, %v894
        %v900 = vadd.f32 %v878, %v892
        %s901 = sld [smem:[#allocation9 + $0x17]]
        %v902 = vstv %s901
        %v903 = vmul.f32 %v902, %v450
        %v904 = vmul.f32 %v902, %v446
        %v905 = vmul.f32 %v902, %v451
        %909 = vrot.lane.b32.xlu0 %v903, 64
        %v910 = vpop.permute.xlu0 %909
        %911 = vrot.lane.b32.xlu0 %v904, 64
        %v912 = vpop.permute.xlu0 %911
        %913 = vrot.lane.b32.xlu0 %v905, 64
        %v914 = vpop.permute.xlu0 %913
        %v915 = vsel %vm540, %v910, %v912
        %v916 = vsel %vm540, %v912, %v914
        %v920 = vadd.f32 %v898, %v915
        %v921 = vadd.f32 %v899, %v916
        %v922 = vadd.f32 %v900, %v914
        %v924 = vlaneseq
        %v925 = vshrl.u32 %v924, 7
        %v926 = vsub.s32 0, %v925
        %v927 = vrot.slane %v455, %v926
        %v928 = vlaneseq
        %v929 = vshrl.u32 %v928, 7
        %v930 = vsub.s32 1, %v929
        %v931 = vrot.slane %v455, %v930
        %932 = vrot.lane.b32.xlu0 %v927, 3
        %v933 = vpop.permute.xlu0 %932
        %934 = vrot.lane.b32.xlu0 %v931, 3
        %v935 = vpop.permute.xlu0 %934
        %vm936 = vcmask 23552
        %v937 = vsel %vm936, %v933, %v935
        %v941 = vmul.f32 %v920, %v933
        %v942 = vmul.f32 %v921, %v937
        %v943 = vmul.f32 %v922, %v935
        %947 = vrot.lane.b32.xlu0 %v941, 125
        %v948 = vpop.permute.xlu0 %947
        %949 = vrot.lane.b32.xlu0 %v942, 125
        %v950 = vpop.permute.xlu0 %949
        %951 = vrot.lane.b32.xlu0 %v943, 125
        %v952 = vpop.permute.xlu0 %951
        %vm953 = vcmask 1022976
        %v954 = vsel %vm953, %v948, %v950
        %v955 = vsel %vm953, %v950, %v952
        %v958 = vadd.f32 %v825, %v954
        %v959 = vadd.f32 %v826, %v955
        %s960 = sld [smem:[#allocation9 + $0x4]]
        %v961 = vstv %s960
        %v962 = vmul.f32 %v961, %v450
        %v963 = vmul.f32 %v961, %v446
        %v964 = vmul.f32 %v961, %v451
        %v965 = vadd.f32 %v962, 0.0
        %v966 = vadd.f32 %v963, 0.0
        %v967 = vadd.f32 %v964, 0.0
        %s968 = sld [smem:[#allocation9 + $0x9]]
        %v969 = vstv %s968
        %v970 = vmul.f32 %v969, %v450
        %v971 = vmul.f32 %v969, %v446
        %v972 = vmul.f32 %v969, %v451
        %976 = vrot.lane.b32.xlu0 %v970, 112
        %v977 = vpop.permute.xlu0 %976
        %978 = vrot.lane.b32.xlu0 %v971, 112
        %v979 = vpop.permute.xlu0 %978
        %980 = vrot.lane.b32.xlu0 %v972, 112
        %v981 = vpop.permute.xlu0 %980
        %v982 = vsel %vm477, %v977, %v979
        %v983 = vsel %vm477, %v979, %v981
        %v987 = vadd.f32 %v965, %v982
        %v988 = vadd.f32 %v966, %v983
        %v989 = vadd.f32 %v967, %v981
        %s990 = sld [smem:[#allocation9 + $0xe]]
        %v991 = vstv %s990
        %v992 = vmul.f32 %v991, %v450
        %v993 = vmul.f32 %v991, %v446
        %v994 = vmul.f32 %v991, %v451
        %998 = vrot.lane.b32.xlu0 %v992, 96
        %v999 = vpop.permute.xlu0 %998
        %1000 = vrot.lane.b32.xlu0 %v993, 96
        %v1001 = vpop.permute.xlu0 %1000
        %1002 = vrot.lane.b32.xlu0 %v994, 96
        %v1003 = vpop.permute.xlu0 %1002
        %v1004 = vsel %vm498, %v999, %v1001
        %v1005 = vsel %vm498, %v1001, %v1003
        %v1009 = vadd.f32 %v987, %v1004
        %v1010 = vadd.f32 %v988, %v1005
        %v1011 = vadd.f32 %v989, %v1003
        %s1012 = sld [smem:[#allocation9 + $0x13]]
        %v1013 = vstv %s1012
        %v1014 = vmul.f32 %v1013, %v450
        %v1015 = vmul.f32 %v1013, %v446
        %v1016 = vmul.f32 %v1013, %v451
        %1020 = vrot.lane.b32.xlu0 %v1014, 80
        %v1021 = vpop.permute.xlu0 %1020
        %1022 = vrot.lane.b32.xlu0 %v1015, 80
        %v1023 = vpop.permute.xlu0 %1022
        %1024 = vrot.lane.b32.xlu0 %v1016, 80
        %v1025 = vpop.permute.xlu0 %1024
        %v1026 = vsel %vm519, %v1021, %v1023
        %v1027 = vsel %vm519, %v1023, %v1025
        %v1031 = vadd.f32 %v1009, %v1026
        %v1032 = vadd.f32 %v1010, %v1027
        %v1033 = vadd.f32 %v1011, %v1025
        %s1034 = sld [smem:[#allocation9 + $0x18]]
        %v1035 = vstv %s1034
        %v1036 = vmul.f32 %v1035, %v450
        %v1037 = vmul.f32 %v1035, %v446
        %v1038 = vmul.f32 %v1035, %v451
        %1042 = vrot.lane.b32.xlu0 %v1036, 64
        %v1043 = vpop.permute.xlu0 %1042
        %1044 = vrot.lane.b32.xlu0 %v1037, 64
        %v1045 = vpop.permute.xlu0 %1044
        %1046 = vrot.lane.b32.xlu0 %v1038, 64
        %v1047 = vpop.permute.xlu0 %1046
        %v1048 = vsel %vm540, %v1043, %v1045
        %v1049 = vsel %vm540, %v1045, %v1047
        %v1053 = vadd.f32 %v1031, %v1048
        %v1054 = vadd.f32 %v1032, %v1049
        %v1055 = vadd.f32 %v1033, %v1047
        %v1057 = vlaneseq
        %v1058 = vshrl.u32 %v1057, 7
        %v1059 = vsub.s32 0, %v1058
        %v1060 = vrot.slane %v456, %v1059
        %v1061 = vlaneseq
        %v1062 = vshrl.u32 %v1061, 7
        %v1063 = vsub.s32 1, %v1062
        %v1064 = vrot.slane %v456, %v1063
        %1065 = vrot.lane.b32.xlu0 %v1060, 4
        %v1066 = vpop.permute.xlu0 %1065
        %1067 = vrot.lane.b32.xlu0 %v1064, 4
        %v1068 = vpop.permute.xlu0 %1067
        %vm1069 = vcmask 31744
        %v1070 = vsel %vm1069, %v1066, %v1068
        %v1074 = vmul.f32 %v1053, %v1066
        %v1075 = vmul.f32 %v1054, %v1070
        %v1076 = vmul.f32 %v1055, %v1068
        %1080 = vrot.lane.b32.xlu0 %v1074, 124
        %v1081 = vpop.permute.xlu0 %1080
        %1082 = vrot.lane.b32.xlu0 %v1075, 124
        %v1083 = vpop.permute.xlu0 %1082
        %1084 = vrot.lane.b32.xlu0 %v1076, 124
        %v1085 = vpop.permute.xlu0 %1084
        %vm1086 = vcmask 1014784
        %v1087 = vsel %vm1086, %v1081, %v1083
        %v1088 = vsel %vm1086, %v1083, %v1085
        %v1091 = vadd.f32 %v958, %v1087
        %v1092 = vadd.f32 %v959, %v1088
        %s1093 = sld [smem:[#allocation11]]
        %v1094 = vstv %s1093
        %v1095 = vmul.f32 %v1091, %v1094
        %v1096 = vmul.f32 %v1092, %v1094
        %s1097 = sld [smem:[#allocation11 + $0x1]]
        %v1098 = vstv %s1097
        %v1099 = vadd.f32 %v1095, %v1098
        %v1100 = vadd.f32 %v1096, %v1098
        %vm1101 = vcmp.gt.f32.partialorder %v1099, 0.0
        %vm1102 = vcmp.gt.f32.partialorder %v1100, 0.0
        %v1103 = vmin.f32 %v1099, 0.0
        %v1104 = vmin.f32 %v1100, 0.0
        %v1105 = vmul.f32 %v1103, 1.442695
        %v1106 = vpow.pop %v1105
        %v1107 = vmul.f32 %v1104, 1.442695
        %v1108 = vpow.pop %v1107
        %v1109 = vsub.f32 %v1106, 1.0
        %v1110 = vsub.f32 %v1108, 1.0
        %v1111 = vmul.f32 %v1109, 1.6732632
        %v1112 = vmul.f32 %v1110, 1.6732632
        %v1113 = vsel %vm1101, %v1099, %v1111
        %v1114 = vsel %vm1102, %v1100, %v1112
        %v1115 = vmul.f32 %v1113, 1.050701
        %v1116 = vmul.f32 %v1114, 1.050701
        %v1119 = vrot.slane %v1115, 1
        %v1120 = vrot.slane %v1116, 1
        %v1123 = vadd.f32 %v1115, %v1119
        %v1124 = vadd.f32 %v1116, %v1120
        %v1125 = vxor.u32 %v1123, 2147483648
        %v1126 = vxor.u32 %v1124, 2147483648
        %v1127 = vmul.f32 %v1125, 1.442695
        %v1128 = vpow.pop %v1127
        %v1129 = vmul.f32 %v1126, 1.442695
        %v1130 = vpow.pop %v1129
        %v1131 = vadd.f32 %v1128, 1.0
        %v1132 = vadd.f32 %v1130, 1.0
        %v1133 = vrcp.pop %v1131
        %v1134 = vmul.f32 1.0, %v1133
        %v1135 = vrcp.pop %v1132
        %v1136 = vmul.f32 1.0, %v1135
        %v1137 = vlaneseq
        %v1138 = vshrl.u32 %v1137, 7
        %v1139 = vsub.s32 0, %v1138
        %v1140 = vrot.slane %v1134, %v1139
        %v1141 = vlaneseq
        %v1142 = vshrl.u32 %v1141, 7
        %v1143 = vsub.s32 0, %v1142
        %v1144 = vrot.slane %v1136, %v1143
        %v1145 = vmul.f32 %v401, %v1140
        %v1146 = vmul.f32 %v402, %v1144
        %v1147 = vmul.f32 %v403, %v1140
        %v1148 = vmul.f32 %v404, %v1144
        %1149 = vst [vmem:[%s296] sm:$0xff] %v1145
        %1150 = vst [vmem:[%s296 + $0x8] sm:$0xff] %v1146
        %1151 = vst [vmem:[%s296 + $0x10] sm:$0xff] %v1147
        %1152 = vst [vmem:[%s296 + $0x18] sm:$0xff] %v1148
        %s1153 = sand.u32 %s143, 1
        %s1154 = scalar_lea.sflag [#allocation4], %s1153
        %s1155 = sand.u32 %s143, 1
        %s1156 = smul.addr %s1155, 32
        %s1157 = scalar_lea.vmem [#allocation12], %s1156
        // Predicated region
        $region61: #{tpu_custom_call.1} parent=39 // pred_check
          %p1158 = pneg %p153
        $region62: #{tpu_custom_call.1} parent=39 // pred_check_branch
          %1160 = sbr.rel (%p1158) target = $region64
        $region63: #{tpu_custom_call.1} parent=39 // pred_region
          %s1162 = ssub.s32 512, 512
          %1163 = vsyncadd %s1154, %s1162
          %s1164 = smul.addr %s25, 4
          %s1165 = smul.addr %s1164, 128
          %s1166 = scalar_lea.hbm %s5, %s1165
          %s1167 = sshll.u32 %s1157, 4
          %s1168 = int_to_ptr.vmem [resolvable:$true] %s1167
          %1173 = dma.vmem_to_hbm [thread:$0]  %s1168, 512, %s1166, %s1154, 256, 256, 16
        $region64: #{tpu_custom_call.1} parent=39 // pred_fallthru
          _
      $region40: #{tpu_custom_call.1} parent=5 // pred_fallthru
        _
      %p1174 = scmp.le.s32.totalorder 2, %s20
      // Predicated region
      $region65: #{tpu_custom_call.1} parent=5 // pred_check
        %p1175 = pneg %p1174
      $region66: #{tpu_custom_call.1} parent=5 // pred_check_branch
        %1177 = sbr.rel (%p1175) target = $region68
      $region67: #{tpu_custom_call.1} parent=5 // pred_region
        %s1178 = ssub.s32 %s20, 2
        // Predicated region
        $region69: #{tpu_custom_call.1} parent=67 // pred_check
          %p1179 = pneg %p159
        $region70: #{tpu_custom_call.1} parent=67 // pred_check_branch
          %1181 = sbr.rel (%p1179) target = $region72
        $region71: #{tpu_custom_call.1} parent=67 // pred_region
          %s1182 = sand.u32 %s144, 1
          %s1183 = scalar_lea.sflag [#allocation4], %s1182
          %s1184 = sand.u32 %s144, 1
          %s1185 = smul.addr %s1184, 32
          %s1186 = scalar_lea.vmem [#allocation12], %s1185
          %1187 = dma.done %s1183, 512
        $region72: #{tpu_custom_call.1} parent=67 // pred_fallthru
          _
      $region68: #{tpu_custom_call.1} parent=5 // pred_fallthru
        _
    $region6: #{tpu_custom_call.1} parent=1 // loop_footer
      %s24 = sadd.s32 1, %s20
    $region7: #{tpu_custom_call.1} parent=1 // loop_footer_branch
      %19 = sbr.rel target = $region3
    $region8: #{tpu_custom_call.1} parent=1 // loop_exit
      _
    %1188 = vsyncpa [#allocation3], 1
    %s1189 = scalar_lea.sflag [#allocation3], 1
    %1190 = vsyncpa %s1189, 1
    %1191 = vsyncpa [#allocation7], 1
    %1192 = vsyncpa [#allocation4], 1
    %s1193 = scalar_lea.sflag [#allocation4], 1
    %1194 = vsyncpa %s1193, 1
    %1195 = vsyncpa [#allocation5], 1
    %s1196 = scalar_lea.sflag [#allocation5], 1
    %1197 = vsyncpa %s1196, 1
    %1198 = vsyncpa [#allocation10], 1

</llo_original>
